<compile_context>
chip_gen: v7x
topology: tpu7x:2x2x1
jax: 0.10.0
libtpu: 0.0.40
codegen_flags: <defaults>
</compile_context>

<pallas_src>
import functools

import jax
import jax.numpy as jnp
from jax.experimental import pallas as pl
from jax.experimental.pallas import tpu as pltpu


def _round_up(x, m):
    return (x + m - 1) // m * m


def _choose_tiling(batch, tile_b_req, sub_req):
    """Pick (tile_b, sub, b_pad): >=2 grid steps when possible (v7x megacore),
    tile_b a multiple of sub, everything a multiple of 16 (bf16 sublane packing)."""
    if batch >= 32:
        tile_b = min(tile_b_req, (batch // 2) // 16 * 16)   # guarantee >= 2 grid steps
    else:
        tile_b = _round_up(batch, 16)
    tile_b = max(16, tile_b)
    sub = max(16, min(sub_req, tile_b))
    tile_b = max(sub, (tile_b // sub) * sub)
    b_pad = _round_up(batch, tile_b)
    return tile_b, sub, b_pad


# ----------------------------------------------------------------------------
# Pallas kernel factory: fused embedding lookup + deep MLP + wide/deep head.
# ----------------------------------------------------------------------------
def make_widedeep_kernel(vocab_sizes, n_cont, hidden_layers, n_class,
                         sub, n_sub, w_row_off, w_shapes, b_row_off):
    n_emb = len(vocab_sizes)
    k1 = sum(vocab_sizes) + n_cont
    voc_off, o = [], 0
    for v in vocab_sizes:
        voc_off.append(o)
        o += v
    cont_base = o
    n_hidden = len(hidden_layers)

    def kernel(*refs):
        pos = 0
        xcat_ref = refs[pos]; pos += 1
        xcont_ref = None
        if n_cont:
            xcont_ref = refs[pos]; pos += 1
        xwide_ref = refs[pos]
        wpack_ref = refs[pos + 1]
        bpack_ref = refs[pos + 2]
        out_ref = refs[pos + 3]

        # Static-offset slices into the packed weight / bias slabs (zero-cost views).
        def w_at(i):
            r0 = w_row_off[i]
            k, n = w_shapes[i]
            return wpack_ref[r0:r0 + k, :n]              # (k, n) bf16

        def b_at(i, n):
            r0 = b_row_off[i]
            return bpack_ref[r0:r0 + 1, :n]              # (1, n) f32

        # Inner loop over row sub-chunks keeps the live f32 activation in vregs.
        @pl.loop(0, n_sub)
        def _(s):
            row = pl.multiple_of(s * sub, sub)
            ids = xcat_ref[pl.ds(row, sub), :]           # (sub, n_emb) int32
            xw = xwide_ref[pl.ds(row, sub), :]           # (sub, wide) bf16

            # ---- merged layer-1 operand: multi-hot categoricals ++ continuous ---
            # Embedding_c(id) @ W1_block == one_hot(id + off_c) @ fused_table; all
            # columns share ONE iota over the merged width so a SINGLE MXU matmul
            # does every lookup and the continuous contribution at once.
            iota = jax.lax.broadcasted_iota(jnp.int32, (sub, k1), 1)
            merged = (iota == (ids[:, 0:1] + voc_off[0])).astype(jnp.float32)
            for c in range(1, n_emb):
                merged = merged + (iota == (ids[:, c:c + 1] + voc_off[c])).astype(jnp.float32)
            if n_cont:
                cont = xcont_ref[pl.ds(row, sub), :].astype(jnp.float32)
                for j in range(n_cont):
                    merged = merged + cont[:, j:j + 1] * (
                        iota == (cont_base + j)).astype(jnp.float32)

            h = jnp.dot(merged.astype(jnp.bfloat16), w_at(0),
                        preferred_element_type=jnp.float32)
            h = jnp.maximum(h + b_at(0, hidden_layers[0]), 0.0)
            # TODO(synk): nn.Dropout is identity in eval mode; training dropout not implemented.

            # ---- remaining hidden layers ----------------------------------------
            for li in range(1, n_hidden):
                h = jnp.dot(h.astype(jnp.bfloat16), w_at(li),
                            preferred_element_type=jnp.float32)
                h = jnp.maximum(h + b_at(li, hidden_layers[li]), 0.0)

            # ---- output head: split into two dots (no lane-axis concat) ---------
            logits = (jnp.dot(h.astype(jnp.bfloat16), w_at(n_hidden),
                              preferred_element_type=jnp.float32)
                      + jnp.dot(xw, w_at(n_hidden + 1),
                                preferred_element_type=jnp.float32)
                      + b_at(n_hidden, n_class))
            # TODO(synk): (sub, 1) store lowers to masked vst; lane-dense batch
            # folding skipped (needs an in-kernel relayout; output bytes are tiny).
            out_ref[pl.ds(row, sub), :] = jax.nn.sigmoid(logits)   # method='logistic'

    return kernel


# ----------------------------------------------------------------------------
# Wrapper: narrow-dtype input split, weight packing, batch tiling, pallas_call.
# ----------------------------------------------------------------------------
def widedeep_forward_pallas(x_deep, x_wide, params, *, emb_specs, continuous_cols,
                            deep_column_idx, hidden_layers, tile_b=2048, sub_b=256):
    batch = x_deep.shape[0]
    wide_dim = x_wide.shape[1]
    n_emb = len(emb_specs)
    n_cont = len(continuous_cols)
    vocab_sizes = tuple(v for _, v, _ in emb_specs)
    h_layers = list(hidden_layers)
    n_class = params["bo"].shape[-1]
    k1 = sum(vocab_sizes) + n_cont
    assert n_emb >= 1
    # TODO(synk): large-vocab columns need a DMA-gather embedding path (scalar-
    # prefetch ids + row gather); the one-hot-in-VMEM trick is only for small vocabs.
    assert sum(vocab_sizes) <= 4096, "one-hot embedding path only for small vocabularies"

    tile_b, sub, b_pad = _choose_tiling(batch, tile_b, sub_b)
    n_sub = tile_b // sub

    # ---- inputs in narrow dtypes (int32 ids, bf16 continuous / wide) ------------
    # (In production feed these already split / already bf16 to skip even this.)
    cat_idx = jnp.asarray([deep_column_idx[c] for c, _, _ in emb_specs], jnp.int32)
    x_cat = jnp.take(x_deep, cat_idx, axis=1).astype(jnp.int32)
    if n_cont:
        cont_idx = jnp.asarray([deep_column_idx[c] for c in continuous_cols], jnp.int32)
        x_cont = jnp.take(x_deep, cont_idx, axis=1).astype(jnp.bfloat16)
    xw = x_wide if x_wide.dtype == jnp.bfloat16 else x_wide.astype(jnp.bfloat16)

    if b_pad != batch:
        pad = b_pad - batch
        x_cat = jnp.pad(x_cat, ((0, pad), (0, 0)))
        if n_cont:
            x_cont = jnp.pad(x_cont, ((0, pad), (0, 0)))
        xw = jnp.pad(xw, ((0, pad), (0, 0)))

    # ---- pack weights into one bf16 slab, biases into one f32 slab --------------
    # (tiny; precompute offline in production)
    pad_w = max(h_layers + [n_class])
    w1 = params["w1"]                                      # (input_dim, h1) f32
    fused_rows, offs = [], 0
    for col, _, dim in emb_specs:
        fused_rows.append(params["emb_tables"][col] @ w1[offs:offs + dim, :])
        offs += dim
    if n_cont:
        fused_rows.append(w1[offs:offs + n_cont, :])
    w_list = [jnp.concatenate(fused_rows, axis=0)]         # fused layer-1: (k1, h1)
    for i in range(2, len(h_layers) + 1):
        w_list.append(params[f"w{i}"])
    wo = params["wo"]                                      # (h_last + wide, n_class)
    w_list.append(wo[:h_layers[-1], :])                    # head, deep part
    w_list.append(wo[h_layers[-1]:, :])                    # head, wide part

    w_row_off, w_shapes, rows = [], [], 0
    for w in w_list:
        w_row_off.append(rows)
        w_shapes.append(tuple(w.shape))
        rows += _round_up(w.shape[0], 8)                   # keep sublane-aligned offsets
    wpack = jnp.zeros((rows, pad_w), jnp.float32)
    for off, w in zip(w_row_off, w_list):
        wpack = jax.lax.dynamic_update_slice(wpack, w.astype(jnp.float32), (off, 0))
    wpack = wpack.astype(jnp.bfloat16)

    b_list = [params[f"b{i}"] for i in range(1, len(h_layers) + 1)] + [params["bo"]]
    b_row_off = [8 * i for i in range(len(b_list))]
    bpack = jnp.zeros((8 * len(b_list), pad_w), jnp.float32)
    for off, b in zip(b_row_off, b_list):
        bpack = jax.lax.dynamic_update_slice(
            bpack, b.reshape(1, -1).astype(jnp.float32), (off, 0))

    # ---- BlockSpecs: activations tiled over batch, packed weights resident ------
    act = lambda d: pl.BlockSpec((tile_b, d), lambda i: (i, 0))
    const = lambda shp: pl.BlockSpec(shp, lambda i: (0, 0))
    inputs, in_specs = [x_cat], [act(n_emb)]
    if n_cont:
        inputs.append(x_cont)
        in_specs.append(act(n_cont))
    inputs += [xw, wpack, bpack]
    in_specs += [act(wide_dim), const(tuple(wpack.shape)), const(tuple(bpack.shape))]
    out_specs = pl.BlockSpec((tile_b, n_class), lambda i: (i, 0))

    # Advisory cost estimate for the XLA scheduler.
    flops_row = 2 * k1 * h_layers[0]
    for i in range(1, len(h_layers)):
        flops_row += 2 * h_layers[i - 1] * h_layers[i]
    flops_row += 2 * (h_layers[-1] + wide_dim) * n_class
    bytes_acc = (b_pad * (4 * n_emb + 2 * n_cont + 2 * wide_dim + 4 * n_class)
                 + int(wpack.size) * 2 + int(bpack.size) * 4)
    cost = pl.CostEstimate(flops=int(b_pad * flops_row),
                           transcendentals=int(b_pad * n_class),
                           bytes_accessed=int(bytes_acc))

    kernel = make_widedeep_kernel(vocab_sizes, n_cont, tuple(h_layers), n_class,
                                  sub, n_sub, tuple(w_row_off), tuple(w_shapes),
                                  tuple(b_row_off))
    out = pl.pallas_call(
        kernel,
        out_shape=jax.ShapeDtypeStruct((b_pad, n_class), jnp.float32),
        grid=(b_pad // tile_b,),
        in_specs=in_specs,
        out_specs=out_specs,
        compiler_params=pltpu.CompilerParams(
            dimension_semantics=("parallel",)),        # >=2 steps => v7x uses both TCs
        cost_estimate=cost,
    )(*inputs)
    return out[:batch]


# ----------------------------------------------------------------------------
# Deterministic synthetic parameters + faithful f32 reference (PyTorch semantics).
# ----------------------------------------------------------------------------
def build_params(key, emb_specs, n_cont, hidden_layers, wide_dim, n_class):
    n_keys = len(emb_specs) + 2 * len(hidden_layers) + 2
    k = iter(jax.random.split(key, n_keys))
    params = {"emb_tables": {}}
    for col, vocab, dim in emb_specs:
        params["emb_tables"][col] = jax.random.normal(next(k), (vocab, dim), jnp.float32) * 0.1
    input_dim = sum(d for _, _, d in emb_specs) + n_cont
    dims = [input_dim] + list(hidden_layers)
    for i in range(1, len(dims)):
        # Stored as [in, out] (PyTorch weight transposed).
        params[f"w{i}"] = jax.random.normal(next(k), (dims[i - 1], dims[i]), jnp.float32) * 0.1
        params[f"b{i}"] = jax.random.normal(next(k), (1, dims[i]), jnp.float32) * 0.1
    params["wo"] = jax.random.normal(next(k), (hidden_layers[-1] + wide_dim, n_class),
                                     jnp.float32) * 0.1
    params["bo"] = jax.random.normal(next(k), (1, n_class), jnp.float32) * 0.1
    return params


def widedeep_reference(x_deep, x_wide, params, emb_specs, continuous_cols,
                       deep_column_idx, hidden_layers):
    pieces = []
    for col, _, _ in emb_specs:
        ids = x_deep[:, deep_column_idx[col]].astype(jnp.int32)
        pieces.append(params["emb_tables"][col][ids])
    if continuous_cols:
        cont_idx = jnp.asarray([deep_column_idx[c] for c in continuous_cols], jnp.int32)
        pieces.append(x_deep[:, cont_idx].astype(jnp.float32))
    deep_in = jnp.concatenate(pieces, axis=1)
    h = jax.nn.relu(deep_in @ params["w1"] + params["b1"])
    for i in range(2, len(hidden_layers) + 1):
        h = jax.nn.relu(h @ params[f"w{i}"] + params[f"b{i}"])
    logits = jnp.concatenate([h, x_wide.astype(jnp.float32)], axis=1) @ params["wo"] + params["bo"]
    return jax.nn.sigmoid(logits)


if __name__ == "__main__":
    # Small synthetic WideDeep config (big enough to exercise a 2-step grid).
    emb_specs = [("workclass", 10, 8), ("education", 12, 8)]      # (col, vocab, emb_dim)
    continuous_cols = ["age", "hours_per_week"]
    deep_column_idx = {"workclass": 0, "education": 1, "age": 2, "hours_per_week": 3}
    hidden_layers = [32, 16]
    wide_dim = 16
    n_class = 1
    batch = 256

    key = jax.random.PRNGKey(0)
    k_par, k_wide, k_cat0, k_cat1, k_cont = jax.random.split(key, 5)

    params = build_params(k_par, emb_specs, len(continuous_cols),
                          hidden_layers, wide_dim, n_class)

    # Deep-side input: categorical id columns + continuous columns, stored float
    # (as the PyTorch model receives it and .long()-casts the categorical cols).
    # Continuous & wide values are rounded to bf16-representable numbers so the
    # bf16-streaming kernel and the f32 reference see identical data.
    cat0 = jax.random.randint(k_cat0, (batch, 1), 0, emb_specs[0][1]).astype(jnp.float32)
    cat1 = jax.random.randint(k_cat1, (batch, 1), 0, emb_specs[1][1]).astype(jnp.float32)
    cont = jax.random.normal(k_cont, (batch, len(continuous_cols)), jnp.float32)
    cont = cont.astype(jnp.bfloat16).astype(jnp.float32)
    x_deep = jnp.concatenate([cat0, cat1, cont], axis=1)           # (B, 4)
    x_wide = jax.random.normal(k_wide, (batch, wide_dim), jnp.float32).astype(jnp.bfloat16)

    fwd = jax.jit(functools.partial(
        widedeep_forward_pallas,
        emb_specs=emb_specs, continuous_cols=continuous_cols,
        deep_column_idx=deep_column_idx, hidden_layers=hidden_layers))

    out = jax.block_until_ready(fwd(x_deep, x_wide, params))

    ref = widedeep_reference(x_deep, x_wide, params, emb_specs, continuous_cols,
                             deep_column_idx, hidden_layers)
    assert out.shape == (batch, n_class)
    max_err = float(jnp.max(jnp.abs(out - ref)))
    assert jnp.allclose(out, ref, atol=1e-2, rtol=1e-2), f"mismatch vs reference, max err {max_err}"

    print("KERNEL_OK")
</pallas_src>

<mosaic_0001>
module attributes {stable_mosaic.version = 11 : i64} {
  func.func @kernel(%arg0: i32, %arg1: memref<128x2xi32, #tpu.memory_space<vmem>>, %arg2: memref<128x2xbf16, #tpu.memory_space<vmem>>, %arg3: memref<128x16xbf16, #tpu.memory_space<vmem>>, %arg4: memref<88x32xbf16, #tpu.memory_space<vmem>>, %arg5: memref<24x32xf32, #tpu.memory_space<vmem>>, %arg6: memref<128x1xf32, #tpu.memory_space<vmem>>) attributes {dimension_semantics = [#tpu.dimension_semantics<parallel>], iteration_bounds = array<i64: 2>, scalar_prefetch = 0 : i64, scratch_operands = 0 : i64, tpu.core_type = #tpu.core_type<tc>, window_params = [{transform_indices = @transform_0, window_bounds = array<i64: 128, 2>}, {transform_indices = @transform_1, window_bounds = array<i64: 128, 2>}, {transform_indices = @transform_2, window_bounds = array<i64: 128, 16>}, {pipeline_mode = #tpu.pipeline_mode<synchronous>, transform_indices = @transform_3, window_bounds = array<i64: 88, 32>}, {pipeline_mode = #tpu.pipeline_mode<synchronous>, transform_indices = @transform_4, window_bounds = array<i64: 24, 32>}, {transform_indices = @transform_5, window_bounds = array<i64: 128, 1>}]} {
    %c0_i32 = arith.constant 0 : i32
    %c1_i32 = arith.constant 1 : i32
    %0 = arith.muli %c0_i32, %c1_i32 : i32
    %c0_i32_0 = arith.constant 0 : i32
    %1 = arith.addi %c0_i32_0, %0 : i32
    %c128_i32 = arith.constant 128 : i32
    %2 = arith.muli %1, %c128_i32 : i32
    %3 = tpu.assume_multiple %2, 128 : i32
    %4 = arith.index_cast %3 : i32 to index
    %c0 = arith.constant 0 : index
    %5 = vector.load %arg1[%4, %c0] : memref<128x2xi32, #tpu.memory_space<vmem>>, vector<128x2xi32>
    %6 = arith.index_cast %3 : i32 to index
    %c0_1 = arith.constant 0 : index
    %7 = vector.load %arg3[%6, %c0_1] : memref<128x16xbf16, #tpu.memory_space<vmem>>, vector<128x16xbf16>
    %8 = tpu.iota {dimensions = array<i32: 1>} : vector<128x24xi32>
    %9 = vector.extract_strided_slice %5 {offsets = [0, 0], sizes = [128, 1], strides = [1, 1]} : vector<128x2xi32> to vector<128x1xi32>
    %c0_i32_2 = arith.constant 0 : i32
    %10 = vector.broadcast %c0_i32_2 : i32 to vector<128x1xi32>
    %11 = arith.addi %9, %10 : vector<128x1xi32>
    %12 = vector.broadcast %11 : vector<128x1xi32> to vector<128x24xi32>
    %13 = arith.cmpi eq, %8, %12 : vector<128x24xi32>
    %14 = arith.extui %13 : vector<128x24xi1> to vector<128x24xi32>
    %15 = arith.sitofp %14 : vector<128x24xi32> to vector<128x24xf32>
    %16 = vector.extract_strided_slice %5 {offsets = [0, 1], sizes = [128, 1], strides = [1, 1]} : vector<128x2xi32> to vector<128x1xi32>
    %c10_i32 = arith.constant 10 : i32
    %17 = vector.broadcast %c10_i32 : i32 to vector<128x1xi32>
    %18 = arith.addi %16, %17 : vector<128x1xi32>
    %19 = vector.broadcast %18 : vector<128x1xi32> to vector<128x24xi32>
    %20 = arith.cmpi eq, %8, %19 : vector<128x24xi32>
    %21 = arith.extui %20 : vector<128x24xi1> to vector<128x24xi32>
    %22 = arith.sitofp %21 : vector<128x24xi32> to vector<128x24xf32>
    %23 = arith.addf %15, %22 : vector<128x24xf32>
    %24 = arith.index_cast %3 : i32 to index
    %c0_3 = arith.constant 0 : index
    %25 = vector.load %arg2[%24, %c0_3] : memref<128x2xbf16, #tpu.memory_space<vmem>>, vector<128x2xbf16>
    %26 = arith.extf %25 : vector<128x2xbf16> to vector<128x2xf32>
    %27 = vector.extract_strided_slice %26 {offsets = [0, 0], sizes = [128, 1], strides = [1, 1]} : vector<128x2xf32> to vector<128x1xf32>
    %c22_i32 = arith.constant 22 : i32
    %28 = vector.broadcast %c22_i32 : i32 to vector<128x24xi32>
    %29 = arith.cmpi eq, %8, %28 : vector<128x24xi32>
    %30 = arith.extui %29 : vector<128x24xi1> to vector<128x24xi32>
    %31 = arith.sitofp %30 : vector<128x24xi32> to vector<128x24xf32>
    %32 = vector.broadcast %27 : vector<128x1xf32> to vector<128x24xf32>
    %33 = arith.mulf %32, %31 : vector<128x24xf32>
    %34 = arith.addf %23, %33 : vector<128x24xf32>
    %35 = vector.extract_strided_slice %26 {offsets = [0, 1], sizes = [128, 1], strides = [1, 1]} : vector<128x2xf32> to vector<128x1xf32>
    %c23_i32 = arith.constant 23 : i32
    %36 = vector.broadcast %c23_i32 : i32 to vector<128x24xi32>
    %37 = arith.cmpi eq, %8, %36 : vector<128x24xi32>
    %38 = arith.extui %37 : vector<128x24xi1> to vector<128x24xi32>
    %39 = arith.sitofp %38 : vector<128x24xi32> to vector<128x24xf32>
    %40 = vector.broadcast %35 : vector<128x1xf32> to vector<128x24xf32>
    %41 = arith.mulf %40, %39 : vector<128x24xf32>
    %42 = arith.addf %34, %41 : vector<128x24xf32>
    %43 = arith.truncf %42 : vector<128x24xf32> to vector<128x24xbf16>
    %c0_4 = arith.constant 0 : index
    %c0_5 = arith.constant 0 : index
    %44 = vector.load %arg4[%c0_4, %c0_5] : memref<88x32xbf16, #tpu.memory_space<vmem>>, vector<24x32xbf16>
    %cst = arith.constant dense<0.000000e+00> : vector<128x32xf32>
    %45 = tpu.matmul %43, %44, %cst {dimension_numbers = #tpu.dot_dimension_numbers<[1], [0], [0], [1], [0, 0, 1, 1], [], []>} : vector<128x24xbf16>, vector<24x32xbf16>, vector<128x32xf32> -> vector<128x32xf32>
    %c0_6 = arith.constant 0 : index
    %c0_7 = arith.constant 0 : index
    %46 = vector.load %arg5[%c0_6, %c0_7] : memref<24x32xf32, #tpu.memory_space<vmem>>, vector<1x32xf32>
    %47 = vector.broadcast %46 : vector<1x32xf32> to vector<128x32xf32>
    %48 = arith.addf %45, %47 : vector<128x32xf32>
    %cst_8 = arith.constant 0.000000e+00 : f32
    %49 = vector.broadcast %cst_8 : f32 to vector<128x32xf32>
    %50 = arith.maximumf %48, %49 : vector<128x32xf32>
    %51 = arith.truncf %50 : vector<128x32xf32> to vector<128x32xbf16>
    %c24 = arith.constant 24 : index
    %c0_9 = arith.constant 0 : index
    %52 = vector.load %arg4[%c24, %c0_9] : memref<88x32xbf16, #tpu.memory_space<vmem>>, vector<32x16xbf16>
    %cst_10 = arith.constant dense<0.000000e+00> : vector<128x16xf32>
    %53 = tpu.matmul %51, %52, %cst_10 {dimension_numbers = #tpu.dot_dimension_numbers<[1], [0], [0], [1], [0, 0, 1, 1], [], []>} : vector<128x32xbf16>, vector<32x16xbf16>, vector<128x16xf32> -> vector<128x16xf32>
    %c8 = arith.constant 8 : index
    %c0_11 = arith.constant 0 : index
    %54 = vector.load %arg5[%c8, %c0_11] : memref<24x32xf32, #tpu.memory_space<vmem>>, vector<1x16xf32>
    %55 = vector.broadcast %54 : vector<1x16xf32> to vector<128x16xf32>
    %56 = arith.addf %53, %55 : vector<128x16xf32>
    %cst_12 = arith.constant 0.000000e+00 : f32
    %57 = vector.broadcast %cst_12 : f32 to vector<128x16xf32>
    %58 = arith.maximumf %56, %57 : vector<128x16xf32>
    %59 = arith.truncf %58 : vector<128x16xf32> to vector<128x16xbf16>
    %c56 = arith.constant 56 : index
    %c0_13 = arith.constant 0 : index
    %60 = vector.load %arg4[%c56, %c0_13] : memref<88x32xbf16, #tpu.memory_space<vmem>>, vector<16x1xbf16>
    %cst_14 = arith.constant dense<0.000000e+00> : vector<128x1xf32>
    %61 = tpu.matmul %59, %60, %cst_14 {dimension_numbers = #tpu.dot_dimension_numbers<[1], [0], [0], [1], [0, 0, 1, 1], [], []>} : vector<128x16xbf16>, vector<16x1xbf16>, vector<128x1xf32> -> vector<128x1xf32>
    %c72 = arith.constant 72 : index
    %c0_15 = arith.constant 0 : index
    %62 = vector.load %arg4[%c72, %c0_15] : memref<88x32xbf16, #tpu.memory_space<vmem>>, vector<16x1xbf16>
    %cst_16 = arith.constant dense<0.000000e+00> : vector<128x1xf32>
    %63 = tpu.matmul %7, %62, %cst_16 {dimension_numbers = #tpu.dot_dimension_numbers<[1], [0], [0], [1], [0, 0, 1, 1], [], []>} : vector<128x16xbf16>, vector<16x1xbf16>, vector<128x1xf32> -> vector<128x1xf32>
    %64 = arith.addf %61, %63 : vector<128x1xf32>
    %c16 = arith.constant 16 : index
    %c0_17 = arith.constant 0 : index
    %65 = vector.load %arg5[%c16, %c0_17] : memref<24x32xf32, #tpu.memory_space<vmem>>, vector<1x1xf32>
    %66 = vector.broadcast %65 : vector<1x1xf32> to vector<128x1xf32>
    %67 = arith.addf %64, %66 : vector<128x1xf32>
    %68 = arith.negf %67 : vector<128x1xf32>
    %69 = math.exp %68 : vector<128x1xf32>
    %cst_18 = arith.constant 1.000000e+00 : f32
    %70 = vector.broadcast %cst_18 : f32 to vector<128x1xf32>
    %71 = arith.addf %70, %69 : vector<128x1xf32>
    %72 = arith.divf %70, %71 : vector<128x1xf32>
    %73 = arith.index_cast %3 : i32 to index
    %c0_19 = arith.constant 0 : index
    %74 = vector.load %arg6[%73, %c0_19] : memref<128x1xf32, #tpu.memory_space<vmem>>, vector<128x1xf32>
    tpu.vector_store %arg6[%73, %c0_19], %72 {strides = array<i32>} : memref<128x1xf32, #tpu.memory_space<vmem>>, vector<128x1xf32>,
    %c1_i32_20 = arith.constant 1 : i32
    return
  }
  func.func @transform_0(%arg0: i32) -> (i32, i32) {
    %c0_i32 = arith.constant 0 : i32
    %c0_i32_0 = arith.constant 0 : i32
    return %arg0, %c0_i32 : i32, i32
  }
  func.func @transform_1(%arg0: i32) -> (i32, i32) {
    %c0_i32 = arith.constant 0 : i32
    %c0_i32_0 = arith.constant 0 : i32
    return %arg0, %c0_i32 : i32, i32
  }
  func.func @transform_2(%arg0: i32) -> (i32, i32) {
    %c0_i32 = arith.constant 0 : i32
    %c0_i32_0 = arith.constant 0 : i32
    return %arg0, %c0_i32 : i32, i32
  }
  func.func @transform_3(%arg0: i32) -> (i32, i32) {
    %c0_i32 = arith.constant 0 : i32
    %c0_i32_0 = arith.constant 0 : i32
    %c0_i32_1 = arith.constant 0 : i32
    return %c0_i32, %c0_i32_0 : i32, i32
  }
  func.func @transform_4(%arg0: i32) -> (i32, i32) {
    %c0_i32 = arith.constant 0 : i32
    %c0_i32_0 = arith.constant 0 : i32
    %c0_i32_1 = arith.constant 0 : i32
    return %c0_i32, %c0_i32_0 : i32, i32
  }
  func.func @transform_5(%arg0: i32) -> (i32, i32) {
    %c0_i32 = arith.constant 0 : i32
    %c0_i32_0 = arith.constant 0 : i32
    return %arg0, %c0_i32 : i32, i32
  }
}

</mosaic_0001>

<llo_original>
// kernel: widedeep_forward_pallas.1
$region0: #{widedeep_forward_pallas.1}
  #allocation0 [shape = 'u32[]', space=smem, size = 0x4, offset = 0x4, fixed_abs, tag = 'smem constant byte address 0x4 - core index']
  #allocation1 [shape = 'u32[144,128]{1,0:T(1,128)}', space=vmem, size = 0x12000, scoped, tag = 'internal scratch']
  %s0 = inlined_call_operand.vmem [shape: s32[256,2], index: 0, kind: input, shape index: {}]
  %s1 = inlined_call_operand.vmem [shape: bf16[256,2], index: 1, kind: input, shape index: {}]
  %s2 = inlined_call_operand.vmem [shape: bf16[256,16], index: 2, kind: input, shape index: {}]
  %s3 = inlined_call_operand.vmem [shape: bf16[88,32], index: 3, kind: input, shape index: {}]
  %s4 = inlined_call_operand.vmem [shape: f32[24,32], index: 4, kind: input, shape index: {}]
  %s5 = inlined_call_operand.vmem [shape: f32[256,1], index: 5, kind: output, shape index: {}]
  %s6 = sld [smem:[#allocation0]]
  $region53: #{widedeep_forward_pallas.1} parent=0
    _
  %s8 = ssub.s32 1, %s6
  %s9 = scalar_select 0, %s8, %s6
  loop: start=0, step=1, limit=4
  $region2: #{widedeep_forward_pallas.1} parent=0 // loop_pre_header
    _
  $region3: #{widedeep_forward_pallas.1} parent=0 // loop_header
    %s11 = sphi 0, %s15
    %p12 = scmp.ge.s32.totalorder %s11, 4
    %s21 = sphi 0, %s23
    %s24 = sphi 0, %s21
    %s25 = sphi 0, %s24
    %s41 = sphi 0, %s25
    %s47 = sphi 0, %s49
    %s50 = sphi 0, %s47
    %s51 = sphi 0, %s50
    %s67 = sphi 0, %s51
    %s73 = sphi 0, %s75
    %s76 = sphi 0, %s73
    %s77 = sphi 0, %s76
    %s93 = sphi 0, %s77
    %s97 = sphi 0, %s97
    %s99 = sphi 0, %s97
    %s100 = sphi 0, %s99
    %s114 = sphi 0, %s100
    %s118 = sphi 0, %s118
    %s120 = sphi 0, %s118
    %s121 = sphi 0, %s120
    %s135 = sphi 0, %s121
    %s141 = sphi 0, %s143
    %s144 = sphi 0, %s141
    %s145 = sphi 0, %s144
    %s161 = sphi 0, %s145
  $region4: #{widedeep_forward_pallas.1} parent=0 // loop_header_branch
    %14 = sbr.rel (%p12) target = $region8
  $region5: #{widedeep_forward_pallas.1} parent=0 // loop_body
    %s16 = ssub.s32 %s11, 1
    %s17 = ssub.s32 %s11, 2
    %s18 = sadd.s32 %s11, 1
    %s19 = ssub.s32 %s11, %s18
    %p20 = scmp.eq.s32.totalorder %s19, 0
    %s22 = sadd.s32 %s21, 1
    %s23 = scalar_select %p20, %s21, %s22
    %p26 = pneg %p20
    %p27 = scmp.eq.s32.totalorder %s11, 1
    %p28 = por %p26, %p27
    %p29 = scmp.ne.s32.totalorder %s21, %s24
    %p30 = scmp.eq.s32.totalorder %s11, 0
    %p31 = por %p29, %p30
    %p32 = scmp.ne.s32.totalorder %s21, %s24
    %p33 = scmp.eq.s32.totalorder %s16, 1
    %p34 = por %p32, %p33
    %p35 = scmp.ne.s32.totalorder %s24, %s25
    %p36 = scmp.eq.s32.totalorder %s16, 0
    %p37 = por %p35, %p36
    %p38 = scmp.ne.s32.totalorder %s24, %s25
    %p39 = scmp.eq.s32.totalorder %s17, 1
    %p40 = por %p38, %p39
    %p42 = scmp.ne.s32.totalorder %s25, %s41
    %p43 = scmp.eq.s32.totalorder %s17, 0
    %p44 = por %p42, %p43
    %s45 = ssub.s32 %s11, %s18
    %p46 = scmp.eq.s32.totalorder %s45, 0
    %s48 = sadd.s32 %s47, 1
    %s49 = scalar_select %p46, %s47, %s48
    %p52 = pneg %p46
    %p53 = scmp.eq.s32.totalorder %s11, 1
    %p54 = por %p52, %p53
    %p55 = scmp.ne.s32.totalorder %s47, %s50
    %p56 = scmp.eq.s32.totalorder %s11, 0
    %p57 = por %p55, %p56
    %p58 = scmp.ne.s32.totalorder %s47, %s50
    %p59 = scmp.eq.s32.totalorder %s16, 1
    %p60 = por %p58, %p59
    %p61 = scmp.ne.s32.totalorder %s50, %s51
    %p62 = scmp.eq.s32.totalorder %s16, 0
    %p63 = por %p61, %p62
    %p64 = scmp.ne.s32.totalorder %s50, %s51
    %p65 = scmp.eq.s32.totalorder %s17, 1
    %p66 = por %p64, %p65
    %p68 = scmp.ne.s32.totalorder %s51, %s67
    %p69 = scmp.eq.s32.totalorder %s17, 0
    %p70 = por %p68, %p69
    %s71 = ssub.s32 %s11, %s18
    %p72 = scmp.eq.s32.totalorder %s71, 0
    %s74 = sadd.s32 %s73, 1
    %s75 = scalar_select %p72, %s73, %s74
    %p78 = pneg %p72
    %p79 = scmp.eq.s32.totalorder %s11, 1
    %p80 = por %p78, %p79
    %p81 = scmp.ne.s32.totalorder %s73, %s76
    %p82 = scmp.eq.s32.totalorder %s11, 0
    %p83 = por %p81, %p82
    %p84 = scmp.ne.s32.totalorder %s73, %s76
    %p85 = scmp.eq.s32.totalorder %s16, 1
    %p86 = por %p84, %p85
    %p87 = scmp.ne.s32.totalorder %s76, %s77
    %p88 = scmp.eq.s32.totalorder %s16, 0
    %p89 = por %p87, %p88
    %p90 = scmp.ne.s32.totalorder %s76, %s77
    %p91 = scmp.eq.s32.totalorder %s17, 1
    %p92 = por %p90, %p91
    %p94 = scmp.ne.s32.totalorder %s77, %s93
    %p95 = scmp.eq.s32.totalorder %s17, 0
    %p96 = por %p94, %p95
    %s98 = sadd.s32 %s97, 1
    %p101 = scmp.eq.s32.totalorder %s11, 1
    %p102 = scmp.ne.s32.totalorder %s97, %s99
    %p103 = scmp.eq.s32.totalorder %s11, 0
    %p104 = por %p102, %p103
    %p105 = scmp.ne.s32.totalorder %s97, %s99
    %p106 = scmp.eq.s32.totalorder %s16, 1
    %p107 = por %p105, %p106
    %p108 = scmp.ne.s32.totalorder %s99, %s100
    %p109 = scmp.eq.s32.totalorder %s16, 0
    %p110 = por %p108, %p109
    %p111 = scmp.ne.s32.totalorder %s99, %s100
    %p112 = scmp.eq.s32.totalorder %s17, 1
    %p113 = por %p111, %p112
    %p115 = scmp.ne.s32.totalorder %s100, %s114
    %p116 = scmp.eq.s32.totalorder %s17, 0
    %p117 = por %p115, %p116
    %s119 = sadd.s32 %s118, 1
    %p122 = scmp.eq.s32.totalorder %s11, 1
    %p123 = scmp.ne.s32.totalorder %s118, %s120
    %p124 = scmp.eq.s32.totalorder %s11, 0
    %p125 = por %p123, %p124
    %p126 = scmp.ne.s32.totalorder %s118, %s120
    %p127 = scmp.eq.s32.totalorder %s16, 1
    %p128 = por %p126, %p127
    %p129 = scmp.ne.s32.totalorder %s120, %s121
    %p130 = scmp.eq.s32.totalorder %s16, 0
    %p131 = por %p129, %p130
    %p132 = scmp.ne.s32.totalorder %s120, %s121
    %p133 = scmp.eq.s32.totalorder %s17, 1
    %p134 = por %p132, %p133
    %p136 = scmp.ne.s32.totalorder %s121, %s135
    %p137 = scmp.eq.s32.totalorder %s17, 0
    %p138 = por %p136, %p137
    %s139 = ssub.s32 %s11, %s18
    %p140 = scmp.eq.s32.totalorder %s139, 0
    %s142 = sadd.s32 %s141, 1
    %s143 = scalar_select %p140, %s141, %s142
    %p146 = pneg %p140
    %p147 = scmp.eq.s32.totalorder %s11, 1
    %p148 = por %p146, %p147
    %p149 = scmp.ne.s32.totalorder %s141, %s144
    %p150 = scmp.eq.s32.totalorder %s11, 0
    %p151 = por %p149, %p150
    %p152 = scmp.ne.s32.totalorder %s141, %s144
    %p153 = scmp.eq.s32.totalorder %s16, 1
    %p154 = por %p152, %p153
    %p155 = scmp.ne.s32.totalorder %s144, %s145
    %p156 = scmp.eq.s32.totalorder %s16, 0
    %p157 = por %p155, %p156
    %p158 = scmp.ne.s32.totalorder %s144, %s145
    %p159 = scmp.eq.s32.totalorder %s17, 1
    %p160 = por %p158, %p159
    %p162 = scmp.ne.s32.totalorder %s145, %s161
    %p163 = scmp.eq.s32.totalorder %s17, 0
    %p164 = por %p162, %p163
    %p165 = scmp.le.s32.totalorder 1, %s11
    %p166 = scmp.lt.s32.totalorder %s11, 3
    %p167 = pnand %p165, %p166
    %p168 = pneg %p167
    // Predicated region
    $region9: #{widedeep_forward_pallas.1} parent=5 // pred_check
      _
    $region10: #{widedeep_forward_pallas.1} parent=5 // pred_check_branch
      %170 = sbr.rel (%p167) target = $region12
    $region11: #{widedeep_forward_pallas.1} parent=5 // pred_region
      %s171 = ssub.s32 %s11, 1
      // Predicated region
      $region13: #{widedeep_forward_pallas.1} parent=11 // pred_check
        %p172 = pneg %p110
      $region14: #{widedeep_forward_pallas.1} parent=11 // pred_check_branch
        %174 = sbr.rel (%p172) target = $region16
      $region15: #{widedeep_forward_pallas.1} parent=11 // pred_region
        _
      $region16: #{widedeep_forward_pallas.1} parent=11 // pred_fallthru
        _
      // Predicated region
      $region17: #{widedeep_forward_pallas.1} parent=11 // pred_check
        %p175 = pneg %p131
      $region18: #{widedeep_forward_pallas.1} parent=11 // pred_check_branch
        %177 = sbr.rel (%p175) target = $region20
      $region19: #{widedeep_forward_pallas.1} parent=11 // pred_region
        _
      $region20: #{widedeep_forward_pallas.1} parent=11 // pred_fallthru
        _
    $region12: #{widedeep_forward_pallas.1} parent=5 // pred_fallthru
      _
    %p178 = scmp.lt.s32.totalorder %s11, 2
    // Predicated region
    $region21: #{widedeep_forward_pallas.1} parent=5 // pred_check
      %p179 = pneg %p178
    $region22: #{widedeep_forward_pallas.1} parent=5 // pred_check_branch
      %181 = sbr.rel (%p179) target = $region24
    $region23: #{widedeep_forward_pallas.1} parent=5 // pred_region
      // Predicated region
      $region25: #{widedeep_forward_pallas.1} parent=23 // pred_check
        %p182 = pneg %p31
      $region26: #{widedeep_forward_pallas.1} parent=23 // pred_check_branch
        %184 = sbr.rel (%p182) target = $region28
      $region27: #{widedeep_forward_pallas.1} parent=23 // pred_region
        %s185 = smul.u32 16, %s11
        %p186 = scmp.lt.s32.totalorder %s185, 31
        %s187 = scalar_select %p186, %s185, 31
        %s188 = smul.addr %s187, 8
        %s189 = scalar_lea.vmem %s0, %s188
        %s190 = smul.u32 16, %s11
      $region28: #{widedeep_forward_pallas.1} parent=23 // pred_fallthru
        _
      // Predicated region
      $region29: #{widedeep_forward_pallas.1} parent=23 // pred_check
        %p191 = pneg %p57
      $region30: #{widedeep_forward_pallas.1} parent=23 // pred_check_branch
        %193 = sbr.rel (%p191) target = $region32
      $region31: #{widedeep_forward_pallas.1} parent=23 // pred_region
        %s194 = smul.u32 16, %s11
        %p195 = scmp.lt.s32.totalorder %s194, 31
        %s196 = scalar_select %p195, %s194, 31
        %s197 = smul.addr %s196, 4
        %s198 = scalar_lea.vmem %s1, %s197
        %s199 = smul.u32 16, %s11
      $region32: #{widedeep_forward_pallas.1} parent=23 // pred_fallthru
        _
      // Predicated region
      $region33: #{widedeep_forward_pallas.1} parent=23 // pred_check
        %p200 = pneg %p83
      $region34: #{widedeep_forward_pallas.1} parent=23 // pred_check_branch
        %202 = sbr.rel (%p200) target = $region36
      $region35: #{widedeep_forward_pallas.1} parent=23 // pred_region
        %s203 = smul.u32 16, %s11
        %p204 = scmp.lt.s32.totalorder %s203, 31
        %s205 = scalar_select %p204, %s203, 31
        %s206 = smul.addr %s205, 4
        %s207 = scalar_lea.vmem %s2, %s206
        %s208 = smul.u32 16, %s11
      $region36: #{widedeep_forward_pallas.1} parent=23 // pred_fallthru
        _
    $region24: #{widedeep_forward_pallas.1} parent=5 // pred_fallthru
      _
    %p209 = scmp.le.s32.totalorder 1, %s11
    %p210 = scmp.lt.s32.totalorder %s11, 3
    %p211 = pnand %p209, %p210
    %p212 = pneg %p211
    // Predicated region
    $region37: #{widedeep_forward_pallas.1} parent=5 // pred_check
      _
    $region38: #{widedeep_forward_pallas.1} parent=5 // pred_check_branch
      %214 = sbr.rel (%p211) target = $region40
    $region39: #{widedeep_forward_pallas.1} parent=5 // pred_region
      %s215 = ssub.s32 %s11, 1
      %s216 = smul.u32 16, %s16
      %p217 = scmp.lt.s32.totalorder %s216, 31
      %s218 = scalar_select %p217, %s216, 31
      %s219 = smul.addr %s218, 8
      %s220 = scalar_lea.vmem %s0, %s219
      %p221 = pneg %p37
      %p222 = pneg %p34
      %s223 = smul.u32 16, %s16
      %p224 = scmp.lt.s32.totalorder %s223, 31
      %s225 = scalar_select %p224, %s223, 31
      %s226 = smul.addr %s225, 4
      %s227 = scalar_lea.vmem %s1, %s226
      %p228 = pneg %p63
      %p229 = pneg %p60
      %s230 = smul.u32 16, %s16
      %p231 = scmp.lt.s32.totalorder %s230, 31
      %s232 = scalar_select %p231, %s230, 31
      %s233 = smul.addr %s232, 4
      %s234 = scalar_lea.vmem %s2, %s233
      %p235 = pneg %p89
      %p236 = pneg %p86
      %p237 = pneg %p110
      %p238 = pneg %p107
      %p239 = pneg %p131
      %p240 = pneg %p128
      %p241 = pneg %p157
      %p242 = pneg %p154
      %s243 = smul.u32 16, %s16
      %p244 = scmp.lt.s32.totalorder %s243, 31
      %s245 = scalar_select %p244, %s243, 31
      %s246 = smul.addr %s245, 8
      %s247 = scalar_lea.vmem %s5, %s246
      %s248 = smul.u32 16, %s16
      %p249 = scmp.lt.s32.totalorder %s248, 31
      %s250 = scalar_select %p249, %s248, 31
      %s251 = smul.addr %s250, 8
      %s252 = scalar_lea.vmem %s0, %s251
      %s253 = smul.u32 16, %s16
      %s254 = smul.u32 16, %s16
      %p255 = scmp.lt.s32.totalorder %s254, 31
      %s256 = scalar_select %p255, %s254, 31
      %s257 = smul.addr %s256, 4
      %s258 = scalar_lea.vmem %s1, %s257
      %s259 = smul.u32 16, %s16
      %s260 = smul.u32 16, %s16
      %p261 = scmp.lt.s32.totalorder %s260, 31
      %s262 = scalar_select %p261, %s260, 31
      %s263 = smul.addr %s262, 4
      %s264 = scalar_lea.vmem %s2, %s263
      %s265 = smul.u32 16, %s16
      %s266 = smul.u32 16, %s16
      %p267 = scmp.lt.s32.totalorder %s266, 31
      %s268 = scalar_select %p267, %s266, 31
      %s269 = smul.addr %s268, 8
      %s270 = scalar_lea.vmem %s5, %s269
      %s271 = smul.u32 16, %s16
      %v273 = vld [vmem:[%s252] sm:$0xff]
      %v274 = vld [vmem:[%s252 + $0x8] sm:$0xff]
      %v275 = vld [vmem:[%s252 + $0x10] sm:$0xff]
      %v276 = vld [vmem:[%s252 + $0x18] sm:$0xff]
      %v277 = vld [vmem:[%s252 + $0x20] sm:$0xff]
      %v278 = vld [vmem:[%s252 + $0x28] sm:$0xff]
      %v279 = vld [vmem:[%s252 + $0x30] sm:$0xff]
      %v280 = vld [vmem:[%s252 + $0x38] sm:$0xff]
      %v281 = vld [vmem:[%s252 + $0x40] sm:$0xff]
      %v282 = vld [vmem:[%s252 + $0x48] sm:$0xff]
      %v283 = vld [vmem:[%s252 + $0x50] sm:$0xff]
      %v284 = vld [vmem:[%s252 + $0x58] sm:$0xff]
      %v285 = vld [vmem:[%s252 + $0x60] sm:$0xff]
      %v286 = vld [vmem:[%s252 + $0x68] sm:$0xff]
      %v287 = vld [vmem:[%s252 + $0x70] sm:$0xff]
      %v288 = vld [vmem:[%s252 + $0x78] sm:$0xff]
      %v289 = vld [vmem:[%s264] sm:$0xf]
      %v290 = vld [vmem:[%s264 + $0x4] sm:$0xf]
      %v291 = vld [vmem:[%s264 + $0x8] sm:$0xf]
      %v292 = vld [vmem:[%s264 + $0xc] sm:$0xf]
      %v293 = vld [vmem:[%s264 + $0x10] sm:$0xf]
      %v294 = vld [vmem:[%s264 + $0x14] sm:$0xf]
      %v295 = vld [vmem:[%s264 + $0x18] sm:$0xf]
      %v296 = vld [vmem:[%s264 + $0x1c] sm:$0xf]
      %v297 = vld [vmem:[%s264 + $0x20] sm:$0xf]
      %v298 = vld [vmem:[%s264 + $0x24] sm:$0xf]
      %v299 = vld [vmem:[%s264 + $0x28] sm:$0xf]
      %v300 = vld [vmem:[%s264 + $0x2c] sm:$0xf]
      %v301 = vld [vmem:[%s264 + $0x30] sm:$0xf]
      %v302 = vld [vmem:[%s264 + $0x34] sm:$0xf]
      %v303 = vld [vmem:[%s264 + $0x38] sm:$0xf]
      %v304 = vld [vmem:[%s264 + $0x3c] sm:$0xf]
      %v305 = vlaneseq
      %v306 = vand.u32 %v305, 127
      %307 = vset.pattern.permute.xlu0 0
      %308 = vperm.xlu0 %307, %v273
      %v309 = vpop.permute.xlu0 %308
      %310 = vset.pattern.permute.xlu0 0
      %311 = vperm.xlu0 %310, %v274
      %v312 = vpop.permute.xlu0 %311
      %313 = vset.pattern.permute.xlu0 0
      %314 = vperm.xlu0 %313, %v275
      %v315 = vpop.permute.xlu0 %314
      %316 = vset.pattern.permute.xlu0 0
      %317 = vperm.xlu0 %316, %v276
      %v318 = vpop.permute.xlu0 %317
      %319 = vset.pattern.permute.xlu0 0
      %320 = vperm.xlu0 %319, %v277
      %v321 = vpop.permute.xlu0 %320
      %322 = vset.pattern.permute.xlu0 0
      %323 = vperm.xlu0 %322, %v278
      %v324 = vpop.permute.xlu0 %323
      %325 = vset.pattern.permute.xlu0 0
      %326 = vperm.xlu0 %325, %v279
      %v327 = vpop.permute.xlu0 %326
      %328 = vset.pattern.permute.xlu0 0
      %329 = vperm.xlu0 %328, %v280
      %v330 = vpop.permute.xlu0 %329
      %331 = vset.pattern.permute.xlu0 0
      %332 = vperm.xlu0 %331, %v281
      %v333 = vpop.permute.xlu0 %332
      %334 = vset.pattern.permute.xlu0 0
      %335 = vperm.xlu0 %334, %v282
      %v336 = vpop.permute.xlu0 %335
      %337 = vset.pattern.permute.xlu0 0
      %338 = vperm.xlu0 %337, %v283
      %v339 = vpop.permute.xlu0 %338
      %340 = vset.pattern.permute.xlu0 0
      %341 = vperm.xlu0 %340, %v284
      %v342 = vpop.permute.xlu0 %341
      %343 = vset.pattern.permute.xlu0 0
      %344 = vperm.xlu0 %343, %v285
      %v345 = vpop.permute.xlu0 %344
      %346 = vset.pattern.permute.xlu0 0
      %347 = vperm.xlu0 %346, %v286
      %v348 = vpop.permute.xlu0 %347
      %349 = vset.pattern.permute.xlu0 0
      %350 = vperm.xlu0 %349, %v287
      %v351 = vpop.permute.xlu0 %350
      %352 = vset.pattern.permute.xlu0 0
      %353 = vperm.xlu0 %352, %v288
      %v354 = vpop.permute.xlu0 %353
      %vm355 = vcmp.eq.s32.totalorder %v306, %v309
      %vm356 = vcmp.eq.s32.totalorder %v306, %v312
      %vm357 = vcmp.eq.s32.totalorder %v306, %v315
      %vm358 = vcmp.eq.s32.totalorder %v306, %v318
      %vm359 = vcmp.eq.s32.totalorder %v306, %v321
      %vm360 = vcmp.eq.s32.totalorder %v306, %v324
      %vm361 = vcmp.eq.s32.totalorder %v306, %v327
      %vm362 = vcmp.eq.s32.totalorder %v306, %v330
      %vm363 = vcmp.eq.s32.totalorder %v306, %v333
      %vm364 = vcmp.eq.s32.totalorder %v306, %v336
      %vm365 = vcmp.eq.s32.totalorder %v306, %v339
      %vm366 = vcmp.eq.s32.totalorder %v306, %v342
      %vm367 = vcmp.eq.s32.totalorder %v306, %v345
      %vm368 = vcmp.eq.s32.totalorder %v306, %v348
      %vm369 = vcmp.eq.s32.totalorder %v306, %v351
      %vm370 = vcmp.eq.s32.totalorder %v306, %v354
      %v371 = vsel %vm355, 1, 0
      %v372 = vsel %vm356, 1, 0
      %v373 = vsel %vm357, 1, 0
      %v374 = vsel %vm358, 1, 0
      %v375 = vsel %vm359, 1, 0
      %v376 = vsel %vm360, 1, 0
      %v377 = vsel %vm361, 1, 0
      %v378 = vsel %vm362, 1, 0
      %v379 = vsel %vm363, 1, 0
      %v380 = vsel %vm364, 1, 0
      %v381 = vsel %vm365, 1, 0
      %v382 = vsel %vm366, 1, 0
      %v383 = vsel %vm367, 1, 0
      %v384 = vsel %vm368, 1, 0
      %v385 = vsel %vm369, 1, 0
      %v386 = vsel %vm370, 1, 0
      %v387 = vcvt.s32.f32 %v371
      %v388 = vcvt.s32.f32 %v372
      %v389 = vcvt.s32.f32 %v373
      %v390 = vcvt.s32.f32 %v374
      %v391 = vcvt.s32.f32 %v375
      %v392 = vcvt.s32.f32 %v376
      %v393 = vcvt.s32.f32 %v377
      %v394 = vcvt.s32.f32 %v378
      %v395 = vcvt.s32.f32 %v379
      %v396 = vcvt.s32.f32 %v380
      %v397 = vcvt.s32.f32 %v381
      %v398 = vcvt.s32.f32 %v382
      %v399 = vcvt.s32.f32 %v383
      %v400 = vcvt.s32.f32 %v384
      %v401 = vcvt.s32.f32 %v385
      %v402 = vcvt.s32.f32 %v386
      %v403 = vadd.s32 %v273, 10
      %v404 = vadd.s32 %v274, 10
      %v405 = vadd.s32 %v275, 10
      %v406 = vadd.s32 %v276, 10
      %v407 = vadd.s32 %v277, 10
      %v408 = vadd.s32 %v278, 10
      %v409 = vadd.s32 %v279, 10
      %v410 = vadd.s32 %v280, 10
      %v411 = vadd.s32 %v281, 10
      %v412 = vadd.s32 %v282, 10
      %v413 = vadd.s32 %v283, 10
      %v414 = vadd.s32 %v284, 10
      %v415 = vadd.s32 %v285, 10
      %v416 = vadd.s32 %v286, 10
      %v417 = vadd.s32 %v287, 10
      %v418 = vadd.s32 %v288, 10
      %419 = vset.pattern.permute.xlu0 1
      %420 = vperm.xlu0 %419, %v403
      %v421 = vpop.permute.xlu0 %420
      %422 = vset.pattern.permute.xlu0 1
      %423 = vperm.xlu0 %422, %v404
      %v424 = vpop.permute.xlu0 %423
      %425 = vset.pattern.permute.xlu0 1
      %426 = vperm.xlu0 %425, %v405
      %v427 = vpop.permute.xlu0 %426
      %428 = vset.pattern.permute.xlu0 1
      %429 = vperm.xlu0 %428, %v406
      %v430 = vpop.permute.xlu0 %429
      %431 = vset.pattern.permute.xlu0 1
      %432 = vperm.xlu0 %431, %v407
      %v433 = vpop.permute.xlu0 %432
      %434 = vset.pattern.permute.xlu0 1
      %435 = vperm.xlu0 %434, %v408
      %v436 = vpop.permute.xlu0 %435
      %437 = vset.pattern.permute.xlu0 1
      %438 = vperm.xlu0 %437, %v409
      %v439 = vpop.permute.xlu0 %438
      %440 = vset.pattern.permute.xlu0 1
      %441 = vperm.xlu0 %440, %v410
      %v442 = vpop.permute.xlu0 %441
      %443 = vset.pattern.permute.xlu0 1
      %444 = vperm.xlu0 %443, %v411
      %v445 = vpop.permute.xlu0 %444
      %446 = vset.pattern.permute.xlu0 1
      %447 = vperm.xlu0 %446, %v412
      %v448 = vpop.permute.xlu0 %447
      %449 = vset.pattern.permute.xlu0 1
      %450 = vperm.xlu0 %449, %v413
      %v451 = vpop.permute.xlu0 %450
      %452 = vset.pattern.permute.xlu0 1
      %453 = vperm.xlu0 %452, %v414
      %v454 = vpop.permute.xlu0 %453
      %455 = vset.pattern.permute.xlu0 1
      %456 = vperm.xlu0 %455, %v415
      %v457 = vpop.permute.xlu0 %456
      %458 = vset.pattern.permute.xlu0 1
      %459 = vperm.xlu0 %458, %v416
      %v460 = vpop.permute.xlu0 %459
      %461 = vset.pattern.permute.xlu0 1
      %462 = vperm.xlu0 %461, %v417
      %v463 = vpop.permute.xlu0 %462
      %464 = vset.pattern.permute.xlu0 1
      %465 = vperm.xlu0 %464, %v418
      %v466 = vpop.permute.xlu0 %465
      %vm467 = vcmp.eq.s32.totalorder %v306, %v421
      %vm468 = vcmp.eq.s32.totalorder %v306, %v424
      %vm469 = vcmp.eq.s32.totalorder %v306, %v427
      %vm470 = vcmp.eq.s32.totalorder %v306, %v430
      %vm471 = vcmp.eq.s32.totalorder %v306, %v433
      %vm472 = vcmp.eq.s32.totalorder %v306, %v436
      %vm473 = vcmp.eq.s32.totalorder %v306, %v439
      %vm474 = vcmp.eq.s32.totalorder %v306, %v442
      %vm475 = vcmp.eq.s32.totalorder %v306, %v445
      %vm476 = vcmp.eq.s32.totalorder %v306, %v448
      %vm477 = vcmp.eq.s32.totalorder %v306, %v451
      %vm478 = vcmp.eq.s32.totalorder %v306, %v454
      %vm479 = vcmp.eq.s32.totalorder %v306, %v457
      %vm480 = vcmp.eq.s32.totalorder %v306, %v460
      %vm481 = vcmp.eq.s32.totalorder %v306, %v463
      %vm482 = vcmp.eq.s32.totalorder %v306, %v466
      %v483 = vsel %vm467, 1, 0
      %v484 = vsel %vm468, 1, 0
      %v485 = vsel %vm469, 1, 0
      %v486 = vsel %vm470, 1, 0
      %v487 = vsel %vm471, 1, 0
      %v488 = vsel %vm472, 1, 0
      %v489 = vsel %vm473, 1, 0
      %v490 = vsel %vm474, 1, 0
      %v491 = vsel %vm475, 1, 0
      %v492 = vsel %vm476, 1, 0
      %v493 = vsel %vm477, 1, 0
      %v494 = vsel %vm478, 1, 0
      %v495 = vsel %vm479, 1, 0
      %v496 = vsel %vm480, 1, 0
      %v497 = vsel %vm481, 1, 0
      %v498 = vsel %vm482, 1, 0
      %v499 = vcvt.s32.f32 %v483
      %v500 = vcvt.s32.f32 %v484
      %v501 = vcvt.s32.f32 %v485
      %v502 = vcvt.s32.f32 %v486
      %v503 = vcvt.s32.f32 %v487
      %v504 = vcvt.s32.f32 %v488
      %v505 = vcvt.s32.f32 %v489
      %v506 = vcvt.s32.f32 %v490
      %v507 = vcvt.s32.f32 %v491
      %v508 = vcvt.s32.f32 %v492
      %v509 = vcvt.s32.f32 %v493
      %v510 = vcvt.s32.f32 %v494
      %v511 = vcvt.s32.f32 %v495
      %v512 = vcvt.s32.f32 %v496
      %v513 = vcvt.s32.f32 %v497
      %v514 = vcvt.s32.f32 %v498
      %v515 = vadd.f32 %v387, %v499
      %v516 = vadd.f32 %v388, %v500
      %v517 = vadd.f32 %v389, %v501
      %v518 = vadd.f32 %v390, %v502
      %v519 = vadd.f32 %v391, %v503
      %v520 = vadd.f32 %v392, %v504
      %v521 = vadd.f32 %v393, %v505
      %v522 = vadd.f32 %v394, %v506
      %v523 = vadd.f32 %v395, %v507
      %v524 = vadd.f32 %v396, %v508
      %v525 = vadd.f32 %v397, %v509
      %v526 = vadd.f32 %v398, %v510
      %v527 = vadd.f32 %v399, %v511
      %v528 = vadd.f32 %v400, %v512
      %v529 = vadd.f32 %v401, %v513
      %v530 = vadd.f32 %v402, %v514
      %v531 = vld [vmem:[%s258] sm:$0xf]
      %v532 = vld [vmem:[%s258 + $0x4] sm:$0xf]
      %v533 = vld [vmem:[%s258 + $0x8] sm:$0xf]
      %v534 = vld [vmem:[%s258 + $0xc] sm:$0xf]
      %v535 = vld [vmem:[%s258 + $0x10] sm:$0xf]
      %v536 = vld [vmem:[%s258 + $0x14] sm:$0xf]
      %v537 = vld [vmem:[%s258 + $0x18] sm:$0xf]
      %v538 = vld [vmem:[%s258 + $0x1c] sm:$0xf]
      %v539 = vld [vmem:[%s258 + $0x20] sm:$0xf]
      %v540 = vld [vmem:[%s258 + $0x24] sm:$0xf]
      %v541 = vld [vmem:[%s258 + $0x28] sm:$0xf]
      %v542 = vld [vmem:[%s258 + $0x2c] sm:$0xf]
      %v543 = vld [vmem:[%s258 + $0x30] sm:$0xf]
      %v544 = vld [vmem:[%s258 + $0x34] sm:$0xf]
      %v545 = vld [vmem:[%s258 + $0x38] sm:$0xf]
      %v546 = vld [vmem:[%s258 + $0x3c] sm:$0xf]
      %v547 = vunpack.c.l.bf16 %v531
      %v548 = vunpack.c.l.bf16 %v532
      %v549 = vunpack.c.l.bf16 %v533
      %v550 = vunpack.c.l.bf16 %v534
      %v551 = vunpack.c.l.bf16 %v535
      %v552 = vunpack.c.l.bf16 %v536
      %v553 = vunpack.c.l.bf16 %v537
      %v554 = vunpack.c.l.bf16 %v538
      %v555 = vunpack.c.l.bf16 %v539
      %v556 = vunpack.c.l.bf16 %v540
      %v557 = vunpack.c.l.bf16 %v541
      %v558 = vunpack.c.l.bf16 %v542
      %v559 = vunpack.c.l.bf16 %v543
      %v560 = vunpack.c.l.bf16 %v544
      %v561 = vunpack.c.l.bf16 %v545
      %v562 = vunpack.c.l.bf16 %v546
      %vm563 = vcmp.eq.s32.totalorder %v306, 22
      %v564 = vsel %vm563, 1, 0
      %v565 = vcvt.s32.f32 %v564
      %567 = vset.pattern.permute.xlu0 0
      %568 = vperm.xlu0 %567, %v547
      %v569 = vpop.permute.xlu0 %568
      %572 = vset.pattern.permute.xlu0 0
      %573 = vperm.xlu0 %572, %v548
      %v574 = vpop.permute.xlu0 %573
      %577 = vset.pattern.permute.xlu0 0
      %578 = vperm.xlu0 %577, %v549
      %v579 = vpop.permute.xlu0 %578
      %582 = vset.pattern.permute.xlu0 0
      %583 = vperm.xlu0 %582, %v550
      %v584 = vpop.permute.xlu0 %583
      %587 = vset.pattern.permute.xlu0 0
      %588 = vperm.xlu0 %587, %v551
      %v589 = vpop.permute.xlu0 %588
      %592 = vset.pattern.permute.xlu0 0
      %593 = vperm.xlu0 %592, %v552
      %v594 = vpop.permute.xlu0 %593
      %597 = vset.pattern.permute.xlu0 0
      %598 = vperm.xlu0 %597, %v553
      %v599 = vpop.permute.xlu0 %598
      %602 = vset.pattern.permute.xlu0 0
      %603 = vperm.xlu0 %602, %v554
      %v604 = vpop.permute.xlu0 %603
      %607 = vset.pattern.permute.xlu0 0
      %608 = vperm.xlu0 %607, %v555
      %v609 = vpop.permute.xlu0 %608
      %612 = vset.pattern.permute.xlu0 0
      %613 = vperm.xlu0 %612, %v556
      %v614 = vpop.permute.xlu0 %613
      %617 = vset.pattern.permute.xlu0 0
      %618 = vperm.xlu0 %617, %v557
      %v619 = vpop.permute.xlu0 %618
      %622 = vset.pattern.permute.xlu0 0
      %623 = vperm.xlu0 %622, %v558
      %v624 = vpop.permute.xlu0 %623
      %627 = vset.pattern.permute.xlu0 0
      %628 = vperm.xlu0 %627, %v559
      %v629 = vpop.permute.xlu0 %628
      %632 = vset.pattern.permute.xlu0 0
      %633 = vperm.xlu0 %632, %v560
      %v634 = vpop.permute.xlu0 %633
      %637 = vset.pattern.permute.xlu0 0
      %638 = vperm.xlu0 %637, %v561
      %v639 = vpop.permute.xlu0 %638
      %642 = vset.pattern.permute.xlu0 0
      %643 = vperm.xlu0 %642, %v562
      %v644 = vpop.permute.xlu0 %643
      %v646 = vmul.f32 %v569, %v565
      %v647 = vmul.f32 %v574, %v565
      %v648 = vmul.f32 %v579, %v565
      %v649 = vmul.f32 %v584, %v565
      %v650 = vmul.f32 %v589, %v565
      %v651 = vmul.f32 %v594, %v565
      %v652 = vmul.f32 %v599, %v565
      %v653 = vmul.f32 %v604, %v565
      %v654 = vmul.f32 %v609, %v565
      %v655 = vmul.f32 %v614, %v565
      %v656 = vmul.f32 %v619, %v565
      %v657 = vmul.f32 %v624, %v565
      %v658 = vmul.f32 %v629, %v565
      %v659 = vmul.f32 %v634, %v565
      %v660 = vmul.f32 %v639, %v565
      %v661 = vmul.f32 %v644, %v565
      %v662 = vadd.f32 %v515, %v646
      %v663 = vadd.f32 %v516, %v647
      %v664 = vadd.f32 %v517, %v648
      %v665 = vadd.f32 %v518, %v649
      %v666 = vadd.f32 %v519, %v650
      %v667 = vadd.f32 %v520, %v651
      %v668 = vadd.f32 %v521, %v652
      %v669 = vadd.f32 %v522, %v653
      %v670 = vadd.f32 %v523, %v654
      %v671 = vadd.f32 %v524, %v655
      %v672 = vadd.f32 %v525, %v656
      %v673 = vadd.f32 %v526, %v657
      %v674 = vadd.f32 %v527, %v658
      %v675 = vadd.f32 %v528, %v659
      %v676 = vadd.f32 %v529, %v660
      %v677 = vadd.f32 %v530, %v661
      %vm678 = vcmp.eq.s32.totalorder %v306, 23
      %v679 = vsel %vm678, 1, 0
      %v680 = vcvt.s32.f32 %v679
      %681 = vset.pattern.permute.xlu0 1
      %682 = vperm.xlu0 %681, %v547
      %v683 = vpop.permute.xlu0 %682
      %685 = vset.pattern.permute.xlu0 1
      %686 = vperm.xlu0 %685, %v548
      %v687 = vpop.permute.xlu0 %686
      %689 = vset.pattern.permute.xlu0 1
      %690 = vperm.xlu0 %689, %v549
      %v691 = vpop.permute.xlu0 %690
      %693 = vset.pattern.permute.xlu0 1
      %694 = vperm.xlu0 %693, %v550
      %v695 = vpop.permute.xlu0 %694
      %697 = vset.pattern.permute.xlu0 1
      %698 = vperm.xlu0 %697, %v551
      %v699 = vpop.permute.xlu0 %698
      %701 = vset.pattern.permute.xlu0 1
      %702 = vperm.xlu0 %701, %v552
      %v703 = vpop.permute.xlu0 %702
      %705 = vset.pattern.permute.xlu0 1
      %706 = vperm.xlu0 %705, %v553
      %v707 = vpop.permute.xlu0 %706
      %709 = vset.pattern.permute.xlu0 1
      %710 = vperm.xlu0 %709, %v554
      %v711 = vpop.permute.xlu0 %710
      %713 = vset.pattern.permute.xlu0 1
      %714 = vperm.xlu0 %713, %v555
      %v715 = vpop.permute.xlu0 %714
      %717 = vset.pattern.permute.xlu0 1
      %718 = vperm.xlu0 %717, %v556
      %v719 = vpop.permute.xlu0 %718
      %721 = vset.pattern.permute.xlu0 1
      %722 = vperm.xlu0 %721, %v557
      %v723 = vpop.permute.xlu0 %722
      %725 = vset.pattern.permute.xlu0 1
      %726 = vperm.xlu0 %725, %v558
      %v727 = vpop.permute.xlu0 %726
      %729 = vset.pattern.permute.xlu0 1
      %730 = vperm.xlu0 %729, %v559
      %v731 = vpop.permute.xlu0 %730
      %733 = vset.pattern.permute.xlu0 1
      %734 = vperm.xlu0 %733, %v560
      %v735 = vpop.permute.xlu0 %734
      %737 = vset.pattern.permute.xlu0 1
      %738 = vperm.xlu0 %737, %v561
      %v739 = vpop.permute.xlu0 %738
      %741 = vset.pattern.permute.xlu0 1
      %742 = vperm.xlu0 %741, %v562
      %v743 = vpop.permute.xlu0 %742
      %v745 = vmul.f32 %v683, %v680
      %v746 = vmul.f32 %v687, %v680
      %v747 = vmul.f32 %v691, %v680
      %v748 = vmul.f32 %v695, %v680
      %v749 = vmul.f32 %v699, %v680
      %v750 = vmul.f32 %v703, %v680
      %v751 = vmul.f32 %v707, %v680
      %v752 = vmul.f32 %v711, %v680
      %v753 = vmul.f32 %v715, %v680
      %v754 = vmul.f32 %v719, %v680
      %v755 = vmul.f32 %v723, %v680
      %v756 = vmul.f32 %v727, %v680
      %v757 = vmul.f32 %v731, %v680
      %v758 = vmul.f32 %v735, %v680
      %v759 = vmul.f32 %v739, %v680
      %v760 = vmul.f32 %v743, %v680
      %v761 = vadd.f32 %v662, %v745
      %v762 = vadd.f32 %v663, %v746
      %v763 = vadd.f32 %v664, %v747
      %v764 = vadd.f32 %v665, %v748
      %v765 = vadd.f32 %v666, %v749
      %v766 = vadd.f32 %v667, %v750
      %v767 = vadd.f32 %v668, %v751
      %v768 = vadd.f32 %v669, %v752
      %v769 = vadd.f32 %v670, %v753
      %v770 = vadd.f32 %v671, %v754
      %v771 = vadd.f32 %v672, %v755
      %v772 = vadd.f32 %v673, %v756
      %v773 = vadd.f32 %v674, %v757
      %v774 = vadd.f32 %v675, %v758
      %v775 = vadd.f32 %v676, %v759
      %v776 = vadd.f32 %v677, %v760
      %v777 = vpack.c.bf16 %v762, %v761
      %v778 = vpack.c.bf16 %v764, %v763
      %v779 = vpack.c.bf16 %v766, %v765
      %v780 = vpack.c.bf16 %v768, %v767
      %v781 = vpack.c.bf16 %v770, %v769
      %v782 = vpack.c.bf16 %v772, %v771
      %v783 = vpack.c.bf16 %v774, %v773
      %v784 = vpack.c.bf16 %v776, %v775
      %v785 = vld [vmem:[%s3] sm:$0xf]
      %v786 = vld [vmem:[%s3 + $0x4] sm:$0xf]
      %v787 = vld [vmem:[%s3 + $0x8] sm:$0xf]
      %v788 = vld [vmem:[%s4] sm:$0x1]
      %v789 = vlaneseq
      %v790 = vshrl.u32 %v789, 7
      %v791 = vsub.s32 0, %v790
      %v792 = vrot.slane %v788, %v791
      %v796 = vunpack.c.l.b16 %v785
      %v797 = vunpack.c.l.b16 %v786
      %v798 = vunpack.c.l.b16 %v787
      %v799 = vpack.c.b16 %v797, %v796
      %v800 = vpack.c.b16 %v798, %v798
      %vm802 = vcmask 195584
      %v804 = vsel %vm802, %v777, 0
      %v807 = vsel %vm802, %v778, 0
      %v810 = vsel %vm802, %v779, 0
      %v813 = vsel %vm802, %v780, 0
      %v816 = vsel %vm802, %v781, 0
      %v819 = vsel %vm802, %v782, 0
      %v822 = vsel %vm802, %v783, 0
      %v825 = vsel %vm802, %v784, 0
      %vm827 = vcmask 1043456
      %v829 = vsel %vm827, %v800, 0
      %831 = vmatprep.subr.bf16.mxu0 0
      %832 = vmatpush1.bf16.msra.mxu0 %v799
      %833 = vmatprep.subr.bf16.mxu0 0
      %834 = vmatpush1.bf16.msra.mxu0 %v829
      %835 = vmatprep.subr.bf16.mxu0 0
      %836 = vmatpush1.bf16.msra.mxu0 0
      %837 = vmatprep.subr.bf16.mxu0 0
      %838 = vmatpush1.bf16.msra.mxu0 0
      %839 = vmatprep.subr.bf16.mxu0 0
      %840 = vmatpush1.bf16.msra.mxu0 0
      %841 = vmatprep.subr.bf16.mxu0 0
      %842 = vmatpush1.bf16.msra.mxu0 0
      %843 = vmatprep.subr.bf16.mxu0 0
      %844 = vmatpush1.bf16.msra.mxu0 0
      %845 = vmatprep.subr.bf16.mxu0 0
      %846 = vmatpush1.bf16.msra.mxu0 0
      %847 = vmatprep.subr.bf16.mxu0 0
      %848 = vmatpush1.bf16.msra.mxu0 0
      %849 = vmatprep.subr.bf16.mxu0 0
      %850 = vmatpush1.bf16.msra.mxu0 0
      %851 = vmatprep.subr.bf16.mxu0 0
      %852 = vmatpush1.bf16.msra.mxu0 0
      %853 = vmatprep.subr.bf16.mxu0 0
      %854 = vmatpush1.bf16.msra.mxu0 0
      %855 = vmatprep.subr.bf16.mxu0 0
      %856 = vmatpush1.bf16.msra.mxu0 0
      %857 = vmatprep.subr.bf16.mxu0 0
      %858 = vmatpush1.bf16.msra.mxu0 0
      %859 = vmatprep.subr.bf16.mxu0 0
      %860 = vmatpush1.bf16.msra.mxu0 0
      %861 = vmatprep.subr.bf16.mxu0 0
      %862 = vmatpush1.bf16.msra.mxu0 0
      %863 = vmatprep.mubr.bf16.mxu0 0
      %864 = vmatmul.mubr.bf16.gmra.mrb[0].mxu0 %v804
      %v865 = vpop.f32.mrb[0].mxu0
      %v866 = vadd.f32 %v792, %v865
      %v867 = vpop.f32.mrb[0].mxu0
      %v868 = vpop.f32.mrb[0].mxu0
      %v869 = vadd.f32 %v792, %v868
      %v870 = vpop.f32.mrb[0].mxu0
      %871 = vmatprep.mubr.bf16.mxu0 0
      %872 = vmatmul.mubr.bf16.gmra.mrb[0].mxu0 %v807
      %v873 = vpop.f32.mrb[0].mxu0
      %v874 = vadd.f32 %v792, %v873
      %v875 = vpop.f32.mrb[0].mxu0
      %v876 = vpop.f32.mrb[0].mxu0
      %v877 = vadd.f32 %v792, %v876
      %v878 = vpop.f32.mrb[0].mxu0
      %879 = vmatprep.mubr.bf16.mxu0 0
      %880 = vmatmul.mubr.bf16.gmra.mrb[0].mxu0 %v810
      %v881 = vpop.f32.mrb[0].mxu0
      %v882 = vadd.f32 %v792, %v881
      %v883 = vpop.f32.mrb[0].mxu0
      %v884 = vpop.f32.mrb[0].mxu0
      %v885 = vadd.f32 %v792, %v884
      %v886 = vpop.f32.mrb[0].mxu0
      %887 = vmatprep.mubr.bf16.mxu0 0
      %888 = vmatmul.mubr.bf16.gmra.mrb[0].mxu0 %v813
      %v889 = vpop.f32.mrb[0].mxu0
      %v890 = vadd.f32 %v792, %v889
      %v891 = vpop.f32.mrb[0].mxu0
      %v892 = vpop.f32.mrb[0].mxu0
      %v893 = vadd.f32 %v792, %v892
      %v894 = vpop.f32.mrb[0].mxu0
      %895 = vmatprep.mubr.bf16.mxu0 0
      %896 = vmatmul.mubr.bf16.gmra.mrb[0].mxu0 %v816
      %v897 = vpop.f32.mrb[0].mxu0
      %v898 = vadd.f32 %v792, %v897
      %v899 = vpop.f32.mrb[0].mxu0
      %v900 = vpop.f32.mrb[0].mxu0
      %v901 = vadd.f32 %v792, %v900
      %v902 = vpop.f32.mrb[0].mxu0
      %903 = vmatprep.mubr.bf16.mxu0 0
      %904 = vmatmul.mubr.bf16.gmra.mrb[0].mxu0 %v819
      %v905 = vpop.f32.mrb[0].mxu0
      %v906 = vadd.f32 %v792, %v905
      %v907 = vpop.f32.mrb[0].mxu0
      %v908 = vpop.f32.mrb[0].mxu0
      %v909 = vadd.f32 %v792, %v908
      %v910 = vpop.f32.mrb[0].mxu0
      %911 = vmatprep.mubr.bf16.mxu0 0
      %912 = vmatmul.mubr.bf16.gmra.mrb[0].mxu0 %v822
      %v913 = vpop.f32.mrb[0].mxu0
      %v914 = vadd.f32 %v792, %v913
      %v915 = vpop.f32.mrb[0].mxu0
      %v916 = vpop.f32.mrb[0].mxu0
      %v917 = vadd.f32 %v792, %v916
      %v918 = vpop.f32.mrb[0].mxu0
      %919 = vmatprep.mubr.bf16.mxu0 0
      %920 = vmatmul.mubr.bf16.gmra.mrb[0].mxu0 %v825
      %v921 = vpop.f32.mrb[0].mxu0
      %v922 = vadd.f32 %v792, %v921
      %v923 = vpop.f32.mrb[0].mxu0
      %v924 = vpop.f32.mrb[0].mxu0
      %v925 = vadd.f32 %v792, %v924
      %v926 = vpop.f32.mrb[0].mxu0
      %927 = vdwg.mxu0
      %v928 = vmax.f32 %v866, 0.0
      %v929 = vmax.f32 %v869, 0.0
      %v930 = vmax.f32 %v874, 0.0
      %v931 = vmax.f32 %v877, 0.0
      %v932 = vmax.f32 %v882, 0.0
      %v933 = vmax.f32 %v885, 0.0
      %v934 = vmax.f32 %v890, 0.0
      %v935 = vmax.f32 %v893, 0.0
      %v936 = vmax.f32 %v898, 0.0
      %v937 = vmax.f32 %v901, 0.0
      %v938 = vmax.f32 %v906, 0.0
      %v939 = vmax.f32 %v909, 0.0
      %v940 = vmax.f32 %v914, 0.0
      %v941 = vmax.f32 %v917, 0.0
      %v942 = vmax.f32 %v922, 0.0
      %v943 = vmax.f32 %v925, 0.0
      %v944 = vpack.c.bf16 %v929, %v928
      %v945 = vpack.c.bf16 %v931, %v930
      %v946 = vpack.c.bf16 %v933, %v932
      %v947 = vpack.c.bf16 %v935, %v934
      %v948 = vpack.c.bf16 %v937, %v936
      %v949 = vpack.c.bf16 %v939, %v938
      %v950 = vpack.c.bf16 %v941, %v940
      %v951 = vpack.c.bf16 %v943, %v942
      %v952 = vld [vmem:[%s3 + $0xc] sm:$0xf]
      %v953 = vld [vmem:[%s3 + $0x10] sm:$0xf]
      %v954 = vld [vmem:[%s3 + $0x14] sm:$0xf]
      %v955 = vld [vmem:[%s3 + $0x18] sm:$0xf]
      %v956 = vld [vmem:[%s4 + $0x8] sm:$0x1]
      %v957 = vlaneseq
      %v958 = vshrl.u32 %v957, 7
      %v959 = vsub.s32 0, %v958
      %v960 = vrot.slane %v956, %v959
      %v965 = vunpack.c.l.b16 %v952
      %v966 = vunpack.c.l.b16 %v953
      %v967 = vunpack.c.l.b16 %v954
      %v968 = vunpack.c.l.b16 %v955
      %v969 = vpack.c.b16 %v966, %v965
      %v970 = vpack.c.b16 %v968, %v967
      %vm973 = vcmask 261120
      %v975 = vsel %vm973, %v944, 0
      %v978 = vsel %vm973, %v945, 0
      %v981 = vsel %vm973, %v946, 0
      %v984 = vsel %vm973, %v947, 0
      %v987 = vsel %vm973, %v948, 0
      %v990 = vsel %vm973, %v949, 0
      %v993 = vsel %vm973, %v950, 0
      %v996 = vsel %vm973, %v951, 0
      %998 = vmatprep.subr.bf16.mxu0 0
      %999 = vmatpush1.bf16.msra.mxu0 %v969
      %1000 = vmatprep.subr.bf16.mxu0 0
      %1001 = vmatpush1.bf16.msra.mxu0 %v970
      %1002 = vmatprep.subr.bf16.mxu0 0
      %1003 = vmatpush1.bf16.msra.mxu0 0
      %1004 = vmatprep.subr.bf16.mxu0 0
      %1005 = vmatpush1.bf16.msra.mxu0 0
      %1006 = vmatprep.subr.bf16.mxu0 0
      %1007 = vmatpush1.bf16.msra.mxu0 0
      %1008 = vmatprep.subr.bf16.mxu0 0
      %1009 = vmatpush1.bf16.msra.mxu0 0
      %1010 = vmatprep.subr.bf16.mxu0 0
      %1011 = vmatpush1.bf16.msra.mxu0 0
      %1012 = vmatprep.subr.bf16.mxu0 0
      %1013 = vmatpush1.bf16.msra.mxu0 0
      %1014 = vmatprep.subr.bf16.mxu0 0
      %1015 = vmatpush1.bf16.msra.mxu0 0
      %1016 = vmatprep.subr.bf16.mxu0 0
      %1017 = vmatpush1.bf16.msra.mxu0 0
      %1018 = vmatprep.subr.bf16.mxu0 0
      %1019 = vmatpush1.bf16.msra.mxu0 0
      %1020 = vmatprep.subr.bf16.mxu0 0
      %1021 = vmatpush1.bf16.msra.mxu0 0
      %1022 = vmatprep.subr.bf16.mxu0 0
      %1023 = vmatpush1.bf16.msra.mxu0 0
      %1024 = vmatprep.subr.bf16.mxu0 0
      %1025 = vmatpush1.bf16.msra.mxu0 0
      %1026 = vmatprep.subr.bf16.mxu0 0
      %1027 = vmatpush1.bf16.msra.mxu0 0
      %1028 = vmatprep.subr.bf16.mxu0 0
      %1029 = vmatpush1.bf16.msra.mxu0 0
      %1030 = vmatprep.mubr.bf16.mxu0 0
      %1031 = vmatmul.mubr.bf16.gmra.mrb[0].mxu0 %v975
      %v1032 = vpop.f32.mrb[0].mxu0
      %v1033 = vadd.f32 %v960, %v1032
      %v1034 = vpop.f32.mrb[0].mxu0
      %v1035 = vpop.f32.mrb[0].mxu0
      %v1036 = vadd.f32 %v960, %v1035
      %v1037 = vpop.f32.mrb[0].mxu0
      %1038 = vmatprep.mubr.bf16.mxu0 0
      %1039 = vmatmul.mubr.bf16.gmra.mrb[0].mxu0 %v978
      %v1040 = vpop.f32.mrb[0].mxu0
      %v1041 = vadd.f32 %v960, %v1040
      %v1042 = vpop.f32.mrb[0].mxu0
      %v1043 = vpop.f32.mrb[0].mxu0
      %v1044 = vadd.f32 %v960, %v1043
      %v1045 = vpop.f32.mrb[0].mxu0
      %1046 = vmatprep.mubr.bf16.mxu0 0
      %1047 = vmatmul.mubr.bf16.gmra.mrb[0].mxu0 %v981
      %v1048 = vpop.f32.mrb[0].mxu0
      %v1049 = vadd.f32 %v960, %v1048
      %v1050 = vpop.f32.mrb[0].mxu0
      %v1051 = vpop.f32.mrb[0].mxu0
      %v1052 = vadd.f32 %v960, %v1051
      %v1053 = vpop.f32.mrb[0].mxu0
      %1054 = vmatprep.mubr.bf16.mxu0 0
      %1055 = vmatmul.mubr.bf16.gmra.mrb[0].mxu0 %v984
      %v1056 = vpop.f32.mrb[0].mxu0
      %v1057 = vadd.f32 %v960, %v1056
      %v1058 = vpop.f32.mrb[0].mxu0
      %v1059 = vpop.f32.mrb[0].mxu0
      %v1060 = vadd.f32 %v960, %v1059
      %v1061 = vpop.f32.mrb[0].mxu0
      %1062 = vmatprep.mubr.bf16.mxu0 0
      %1063 = vmatmul.mubr.bf16.gmra.mrb[0].mxu0 %v987
      %v1064 = vpop.f32.mrb[0].mxu0
      %v1065 = vadd.f32 %v960, %v1064
      %v1066 = vpop.f32.mrb[0].mxu0
      %v1067 = vpop.f32.mrb[0].mxu0
      %v1068 = vadd.f32 %v960, %v1067
      %v1069 = vpop.f32.mrb[0].mxu0
      %1070 = vmatprep.mubr.bf16.mxu0 0
      %1071 = vmatmul.mubr.bf16.gmra.mrb[0].mxu0 %v990
      %v1072 = vpop.f32.mrb[0].mxu0
      %v1073 = vadd.f32 %v960, %v1072
      %v1074 = vpop.f32.mrb[0].mxu0
      %v1075 = vpop.f32.mrb[0].mxu0
      %v1076 = vadd.f32 %v960, %v1075
      %v1077 = vpop.f32.mrb[0].mxu0
      %1078 = vmatprep.mubr.bf16.mxu0 0
      %1079 = vmatmul.mubr.bf16.gmra.mrb[0].mxu0 %v993
      %v1080 = vpop.f32.mrb[0].mxu0
      %v1081 = vadd.f32 %v960, %v1080
      %v1082 = vpop.f32.mrb[0].mxu0
      %v1083 = vpop.f32.mrb[0].mxu0
      %v1084 = vadd.f32 %v960, %v1083
      %v1085 = vpop.f32.mrb[0].mxu0
      %1086 = vmatprep.mubr.bf16.mxu0 0
      %1087 = vmatmul.mubr.bf16.gmra.mrb[0].mxu0 %v996
      %v1088 = vpop.f32.mrb[0].mxu0
      %v1089 = vadd.f32 %v960, %v1088
      %v1090 = vpop.f32.mrb[0].mxu0
      %v1091 = vpop.f32.mrb[0].mxu0
      %v1092 = vadd.f32 %v960, %v1091
      %v1093 = vpop.f32.mrb[0].mxu0
      %1094 = vdwg.mxu0
      %v1095 = vmax.f32 %v1033, 0.0
      %v1096 = vmax.f32 %v1036, 0.0
      %v1097 = vmax.f32 %v1041, 0.0
      %v1098 = vmax.f32 %v1044, 0.0
      %v1099 = vmax.f32 %v1049, 0.0
      %v1100 = vmax.f32 %v1052, 0.0
      %v1101 = vmax.f32 %v1057, 0.0
      %v1102 = vmax.f32 %v1060, 0.0
      %v1103 = vmax.f32 %v1065, 0.0
      %v1104 = vmax.f32 %v1068, 0.0
      %v1105 = vmax.f32 %v1073, 0.0
      %v1106 = vmax.f32 %v1076, 0.0
      %v1107 = vmax.f32 %v1081, 0.0
      %v1108 = vmax.f32 %v1084, 0.0
      %v1109 = vmax.f32 %v1089, 0.0
      %v1110 = vmax.f32 %v1092, 0.0
      %v1111 = vpack.c.bf16 %v1096, %v1095
      %v1112 = vpack.c.bf16 %v1098, %v1097
      %v1113 = vpack.c.bf16 %v1100, %v1099
      %v1114 = vpack.c.bf16 %v1102, %v1101
      %v1115 = vpack.c.bf16 %v1104, %v1103
      %v1116 = vpack.c.bf16 %v1106, %v1105
      %v1117 = vpack.c.bf16 %v1108, %v1107
      %v1118 = vpack.c.bf16 %v1110, %v1109
      %v1119 = vld [vmem:[%s3 + $0x1c] sm:$0xf]
      %v1120 = vld [vmem:[%s3 + $0x20] sm:$0xf]
      %v1121 = vld [vmem:[%s3 + $0x24] sm:$0xf]
      %v1122 = vld [vmem:[%s3 + $0x28] sm:$0xf]
      %v1139 = vunpack.c.l.b16 %v289
      %v1140 = vunpack.c.l.b16 %v290
      %v1141 = vunpack.c.l.b16 %v291
      %v1142 = vunpack.c.l.b16 %v292
      %v1143 = vunpack.c.l.b16 %v293
      %v1144 = vunpack.c.l.b16 %v294
      %v1145 = vunpack.c.l.b16 %v295
      %v1146 = vunpack.c.l.b16 %v296
      %v1147 = vunpack.c.l.b16 %v297
      %v1148 = vunpack.c.l.b16 %v298
      %v1149 = vunpack.c.l.b16 %v299
      %v1150 = vunpack.c.l.b16 %v300
      %v1151 = vunpack.c.l.b16 %v301
      %v1152 = vunpack.c.l.b16 %v302
      %v1153 = vunpack.c.l.b16 %v303
      %v1154 = vunpack.c.l.b16 %v304
      %v1155 = vpack.c.b16 %v1140, %v1139
      %v1156 = vpack.c.b16 %v1142, %v1141
      %v1157 = vpack.c.b16 %v1144, %v1143
      %v1158 = vpack.c.b16 %v1146, %v1145
      %v1159 = vpack.c.b16 %v1148, %v1147
      %v1160 = vpack.c.b16 %v1150, %v1149
      %v1161 = vpack.c.b16 %v1152, %v1151
      %v1162 = vpack.c.b16 %v1154, %v1153
      %v1165 = vunpack.c.l.b16 %v1121
      %v1166 = vunpack.c.l.b16 %v1122
      %v1167 = vpack.c.b16 %v1166, %v1165
      %vm1169 = vcmask 130048
      %v1171 = vsel %vm1169, %v1155, 0
      %v1174 = vsel %vm1169, %v1156, 0
      %v1177 = vsel %vm1169, %v1157, 0
      %v1180 = vsel %vm1169, %v1158, 0
      %v1183 = vsel %vm1169, %v1159, 0
      %v1186 = vsel %vm1169, %v1160, 0
      %v1189 = vsel %vm1169, %v1161, 0
      %v1192 = vsel %vm1169, %v1162, 0
      %1194 = vmatprep.subr.bf16.mxu0 0
      %1195 = vmatpush1.bf16.msra.mxu0 %v1167
      %1196 = vmatprep.subr.bf16.mxu0 0
      %1197 = vmatpush1.bf16.msra.mxu0 0
      %1198 = vmatprep.subr.bf16.mxu0 0
      %1199 = vmatpush1.bf16.msra.mxu0 0
      %1200 = vmatprep.subr.bf16.mxu0 0
      %1201 = vmatpush1.bf16.msra.mxu0 0
      %1202 = vmatprep.subr.bf16.mxu0 0
      %1203 = vmatpush1.bf16.msra.mxu0 0
      %1204 = vmatprep.subr.bf16.mxu0 0
      %1205 = vmatpush1.bf16.msra.mxu0 0
      %1206 = vmatprep.subr.bf16.mxu0 0
      %1207 = vmatpush1.bf16.msra.mxu0 0
      %1208 = vmatprep.subr.bf16.mxu0 0
      %1209 = vmatpush1.bf16.msra.mxu0 0
      %1210 = vmatprep.subr.bf16.mxu0 0
      %1211 = vmatpush1.bf16.msra.mxu0 0
      %1212 = vmatprep.subr.bf16.mxu0 0
      %1213 = vmatpush1.bf16.msra.mxu0 0
      %1214 = vmatprep.subr.bf16.mxu0 0
      %1215 = vmatpush1.bf16.msra.mxu0 0
      %1216 = vmatprep.subr.bf16.mxu0 0
      %1217 = vmatpush1.bf16.msra.mxu0 0
      %1218 = vmatprep.subr.bf16.mxu0 0
      %1219 = vmatpush1.bf16.msra.mxu0 0
      %1220 = vmatprep.subr.bf16.mxu0 0
      %1221 = vmatpush1.bf16.msra.mxu0 0
      %1222 = vmatprep.subr.bf16.mxu0 0
      %1223 = vmatpush1.bf16.msra.mxu0 0
      %1224 = vmatprep.subr.bf16.mxu0 0
      %1225 = vmatpush1.bf16.msra.mxu0 0
      %1226 = vmatprep.mubr.bf16.mxu0 0
      %1227 = vmatmul.mubr.bf16.gmra.mrb[0].mxu0 %v1171
      %v1228 = vpop.f32.mrb[0].mxu0
      %v1229 = vadd.f32 0.0, %v1228
      %v1230 = vpop.f32.mrb[0].mxu0
      %v1231 = vpop.f32.mrb[0].mxu0
      %v1232 = vadd.f32 0.0, %v1231
      %v1233 = vpop.f32.mrb[0].mxu0
      %1234 = vmatprep.mubr.bf16.mxu0 0
      %1235 = vmatmul.mubr.bf16.gmra.mrb[0].mxu0 %v1174
      %v1236 = vpop.f32.mrb[0].mxu0
      %v1237 = vadd.f32 0.0, %v1236
      %v1238 = vpop.f32.mrb[0].mxu0
      %v1239 = vpop.f32.mrb[0].mxu0
      %v1240 = vadd.f32 0.0, %v1239
      %v1241 = vpop.f32.mrb[0].mxu0
      %1242 = vmatprep.mubr.bf16.mxu0 0
      %1243 = vmatmul.mubr.bf16.gmra.mrb[0].mxu0 %v1177
      %v1244 = vpop.f32.mrb[0].mxu0
      %v1245 = vadd.f32 0.0, %v1244
      %v1246 = vpop.f32.mrb[0].mxu0
      %v1247 = vpop.f32.mrb[0].mxu0
      %v1248 = vadd.f32 0.0, %v1247
      %v1249 = vpop.f32.mrb[0].mxu0
      %1250 = vmatprep.mubr.bf16.mxu0 0
      %1251 = vmatmul.mubr.bf16.gmra.mrb[0].mxu0 %v1180
      %v1252 = vpop.f32.mrb[0].mxu0
      %v1253 = vadd.f32 0.0, %v1252
      %v1254 = vpop.f32.mrb[0].mxu0
      %v1255 = vpop.f32.mrb[0].mxu0
      %v1256 = vadd.f32 0.0, %v1255
      %v1257 = vpop.f32.mrb[0].mxu0
      %1258 = vmatprep.mubr.bf16.mxu0 0
      %1259 = vmatmul.mubr.bf16.gmra.mrb[0].mxu0 %v1183
      %v1260 = vpop.f32.mrb[0].mxu0
      %v1261 = vadd.f32 0.0, %v1260
      %v1262 = vpop.f32.mrb[0].mxu0
      %v1263 = vpop.f32.mrb[0].mxu0
      %v1264 = vadd.f32 0.0, %v1263
      %v1265 = vpop.f32.mrb[0].mxu0
      %1266 = vmatprep.mubr.bf16.mxu0 0
      %1267 = vmatmul.mubr.bf16.gmra.mrb[0].mxu0 %v1186
      %v1268 = vpop.f32.mrb[0].mxu0
      %v1269 = vadd.f32 0.0, %v1268
      %v1270 = vpop.f32.mrb[0].mxu0
      %v1271 = vpop.f32.mrb[0].mxu0
      %v1272 = vadd.f32 0.0, %v1271
      %v1273 = vpop.f32.mrb[0].mxu0
      %1274 = vmatprep.mubr.bf16.mxu0 0
      %1275 = vmatmul.mubr.bf16.gmra.mrb[0].mxu0 %v1189
      %v1276 = vpop.f32.mrb[0].mxu0
      %v1277 = vadd.f32 0.0, %v1276
      %v1278 = vpop.f32.mrb[0].mxu0
      %v1279 = vpop.f32.mrb[0].mxu0
      %v1280 = vadd.f32 0.0, %v1279
      %v1281 = vpop.f32.mrb[0].mxu0
      %1282 = vmatprep.mubr.bf16.mxu0 0
      %1283 = vmatmul.mubr.bf16.gmra.mrb[0].mxu0 %v1192
      %v1284 = vpop.f32.mrb[0].mxu0
      %v1285 = vadd.f32 0.0, %v1284
      %v1286 = vpop.f32.mrb[0].mxu0
      %v1287 = vpop.f32.mrb[0].mxu0
      %v1288 = vadd.f32 0.0, %v1287
      %v1289 = vpop.f32.mrb[0].mxu0
      %1290 = vdwg.mxu0
      %v1293 = vunpack.c.l.b16 %v1119
      %v1294 = vunpack.c.l.b16 %v1120
      %v1295 = vpack.c.b16 %v1294, %v1293
      %v1298 = vsel %vm1169, %v1111, 0
      %v1301 = vsel %vm1169, %v1112, 0
      %v1304 = vsel %vm1169, %v1113, 0
      %v1307 = vsel %vm1169, %v1114, 0
      %v1310 = vsel %vm1169, %v1115, 0
      %v1313 = vsel %vm1169, %v1116, 0
      %v1316 = vsel %vm1169, %v1117, 0
      %v1319 = vsel %vm1169, %v1118, 0
      %1321 = vmatprep.subr.bf16.mxu0 0
      %1322 = vmatpush1.bf16.msra.mxu0 %v1295
      %1323 = vmatprep.subr.bf16.mxu0 0
      %1324 = vmatpush1.bf16.msra.mxu0 0
      %1325 = vmatprep.subr.bf16.mxu0 0
      %1326 = vmatpush1.bf16.msra.mxu0 0
      %1327 = vmatprep.subr.bf16.mxu0 0
      %1328 = vmatpush1.bf16.msra.mxu0 0
      %1329 = vmatprep.subr.bf16.mxu0 0
      %1330 = vmatpush1.bf16.msra.mxu0 0
      %1331 = vmatprep.subr.bf16.mxu0 0
      %1332 = vmatpush1.bf16.msra.mxu0 0
      %1333 = vmatprep.subr.bf16.mxu0 0
      %1334 = vmatpush1.bf16.msra.mxu0 0
      %1335 = vmatprep.subr.bf16.mxu0 0
      %1336 = vmatpush1.bf16.msra.mxu0 0
      %1337 = vmatprep.subr.bf16.mxu0 0
      %1338 = vmatpush1.bf16.msra.mxu0 0
      %1339 = vmatprep.subr.bf16.mxu0 0
      %1340 = vmatpush1.bf16.msra.mxu0 0
      %1341 = vmatprep.subr.bf16.mxu0 0
      %1342 = vmatpush1.bf16.msra.mxu0 0
      %1343 = vmatprep.subr.bf16.mxu0 0
      %1344 = vmatpush1.bf16.msra.mxu0 0
      %1345 = vmatprep.subr.bf16.mxu0 0
      %1346 = vmatpush1.bf16.msra.mxu0 0
      %1347 = vmatprep.subr.bf16.mxu0 0
      %1348 = vmatpush1.bf16.msra.mxu0 0
      %1349 = vmatprep.subr.bf16.mxu0 0
      %1350 = vmatpush1.bf16.msra.mxu0 0
      %1351 = vmatprep.subr.bf16.mxu0 0
      %1352 = vmatpush1.bf16.msra.mxu0 0
      %1353 = vmatprep.mubr.bf16.mxu0 0
      %1354 = vmatmul.mubr.bf16.gmra.mrb[0].mxu0 %v1298
      %v1355 = vpop.f32.mrb[0].mxu0
      %v1356 = vadd.f32 %v1229, %v1355
      %v1357 = vpop.f32.mrb[0].mxu0
      %v1358 = vpop.f32.mrb[0].mxu0
      %v1359 = vadd.f32 %v1232, %v1358
      %v1360 = vpop.f32.mrb[0].mxu0
      %1361 = vmatprep.mubr.bf16.mxu0 0
      %1362 = vmatmul.mubr.bf16.gmra.mrb[0].mxu0 %v1301
      %v1363 = vpop.f32.mrb[0].mxu0
      %v1364 = vadd.f32 %v1237, %v1363
      %v1365 = vpop.f32.mrb[0].mxu0
      %v1366 = vpop.f32.mrb[0].mxu0
      %v1367 = vadd.f32 %v1240, %v1366
      %v1368 = vpop.f32.mrb[0].mxu0
      %1369 = vmatprep.mubr.bf16.mxu0 0
      %1370 = vmatmul.mubr.bf16.gmra.mrb[0].mxu0 %v1304
      %v1371 = vpop.f32.mrb[0].mxu0
      %v1372 = vadd.f32 %v1245, %v1371
      %v1373 = vpop.f32.mrb[0].mxu0
      %v1374 = vpop.f32.mrb[0].mxu0
      %v1375 = vadd.f32 %v1248, %v1374
      %v1376 = vpop.f32.mrb[0].mxu0
      %1377 = vmatprep.mubr.bf16.mxu0 0
      %1378 = vmatmul.mubr.bf16.gmra.mrb[0].mxu0 %v1307
      %v1379 = vpop.f32.mrb[0].mxu0
      %v1380 = vadd.f32 %v1253, %v1379
      %v1381 = vpop.f32.mrb[0].mxu0
      %v1382 = vpop.f32.mrb[0].mxu0
      %v1383 = vadd.f32 %v1256, %v1382
      %v1384 = vpop.f32.mrb[0].mxu0
      %1385 = vmatprep.mubr.bf16.mxu0 0
      %1386 = vmatmul.mubr.bf16.gmra.mrb[0].mxu0 %v1310
      %v1387 = vpop.f32.mrb[0].mxu0
      %v1388 = vadd.f32 %v1261, %v1387
      %v1389 = vpop.f32.mrb[0].mxu0
      %v1390 = vpop.f32.mrb[0].mxu0
      %v1391 = vadd.f32 %v1264, %v1390
      %v1392 = vpop.f32.mrb[0].mxu0
      %1393 = vmatprep.mubr.bf16.mxu0 0
      %1394 = vmatmul.mubr.bf16.gmra.mrb[0].mxu0 %v1313
      %v1395 = vpop.f32.mrb[0].mxu0
      %v1396 = vadd.f32 %v1269, %v1395
      %v1397 = vpop.f32.mrb[0].mxu0
      %v1398 = vpop.f32.mrb[0].mxu0
      %v1399 = vadd.f32 %v1272, %v1398
      %v1400 = vpop.f32.mrb[0].mxu0
      %1401 = vmatprep.mubr.bf16.mxu0 0
      %1402 = vmatmul.mubr.bf16.gmra.mrb[0].mxu0 %v1316
      %v1403 = vpop.f32.mrb[0].mxu0
      %v1404 = vadd.f32 %v1277, %v1403
      %v1405 = vpop.f32.mrb[0].mxu0
      %v1406 = vpop.f32.mrb[0].mxu0
      %v1407 = vadd.f32 %v1280, %v1406
      %v1408 = vpop.f32.mrb[0].mxu0
      %1409 = vmatprep.mubr.bf16.mxu0 0
      %1410 = vmatmul.mubr.bf16.gmra.mrb[0].mxu0 %v1319
      %v1411 = vpop.f32.mrb[0].mxu0
      %v1412 = vadd.f32 %v1285, %v1411
      %v1413 = vpop.f32.mrb[0].mxu0
      %v1414 = vpop.f32.mrb[0].mxu0
      %v1415 = vadd.f32 %v1288, %v1414
      %v1416 = vpop.f32.mrb[0].mxu0
      %1417 = vdwg.mxu0
      %v1418 = vld [vmem:[%s4 + $0x10] sm:$0x1]
      %v1419 = vlaneseq
      %v1420 = vshrl.u32 %v1419, 7
      %v1421 = vsub.s32 0, %v1420
      %v1422 = vrot.slane %v1418, %v1421
      %v1423 = vadd.f32 %v1356, %v1422
      %v1424 = vadd.f32 %v1359, %v1422
      %v1425 = vadd.f32 %v1364, %v1422
      %v1426 = vadd.f32 %v1367, %v1422
      %v1427 = vadd.f32 %v1372, %v1422
      %v1428 = vadd.f32 %v1375, %v1422
      %v1429 = vadd.f32 %v1380, %v1422
      %v1430 = vadd.f32 %v1383, %v1422
      %v1431 = vadd.f32 %v1388, %v1422
      %v1432 = vadd.f32 %v1391, %v1422
      %v1433 = vadd.f32 %v1396, %v1422
      %v1434 = vadd.f32 %v1399, %v1422
      %v1435 = vadd.f32 %v1404, %v1422
      %v1436 = vadd.f32 %v1407, %v1422
      %v1437 = vadd.f32 %v1412, %v1422
      %v1438 = vadd.f32 %v1415, %v1422
      %v1439 = vxor.u32 %v1423, 2147483648
      %v1440 = vxor.u32 %v1424, 2147483648
      %v1441 = vxor.u32 %v1425, 2147483648
      %v1442 = vxor.u32 %v1426, 2147483648
      %v1443 = vxor.u32 %v1427, 2147483648
      %v1444 = vxor.u32 %v1428, 2147483648
      %v1445 = vxor.u32 %v1429, 2147483648
      %v1446 = vxor.u32 %v1430, 2147483648
      %v1447 = vxor.u32 %v1431, 2147483648
      %v1448 = vxor.u32 %v1432, 2147483648
      %v1449 = vxor.u32 %v1433, 2147483648
      %v1450 = vxor.u32 %v1434, 2147483648
      %v1451 = vxor.u32 %v1435, 2147483648
      %v1452 = vxor.u32 %v1436, 2147483648
      %v1453 = vxor.u32 %v1437, 2147483648
      %v1454 = vxor.u32 %v1438, 2147483648
      %v1455 = vmul.f32 %v1439, 1.442695
      %v1456 = vpow.pop %v1455
      %v1457 = vmul.f32 %v1440, 1.442695
      %v1458 = vpow.pop %v1457
      %v1459 = vmul.f32 %v1441, 1.442695
      %v1460 = vpow.pop %v1459
      %v1461 = vmul.f32 %v1442, 1.442695
      %v1462 = vpow.pop %v1461
      %v1463 = vmul.f32 %v1443, 1.442695
      %v1464 = vpow.pop %v1463
      %v1465 = vmul.f32 %v1444, 1.442695
      %v1466 = vpow.pop %v1465
      %v1467 = vmul.f32 %v1445, 1.442695
      %v1468 = vpow.pop %v1467
      %v1469 = vmul.f32 %v1446, 1.442695
      %v1470 = vpow.pop %v1469
      %v1471 = vmul.f32 %v1447, 1.442695
      %v1472 = vpow.pop %v1471
      %v1473 = vmul.f32 %v1448, 1.442695
      %v1474 = vpow.pop %v1473
      %v1475 = vmul.f32 %v1449, 1.442695
      %v1476 = vpow.pop %v1475
      %v1477 = vmul.f32 %v1450, 1.442695
      %v1478 = vpow.pop %v1477
      %v1479 = vmul.f32 %v1451, 1.442695
      %v1480 = vpow.pop %v1479
      %v1481 = vmul.f32 %v1452, 1.442695
      %v1482 = vpow.pop %v1481
      %v1483 = vmul.f32 %v1453, 1.442695
      %v1484 = vpow.pop %v1483
      %v1485 = vmul.f32 %v1454, 1.442695
      %v1486 = vpow.pop %v1485
      %v1487 = vadd.f32 %v1456, 1.0
      %v1488 = vadd.f32 %v1458, 1.0
      %v1489 = vadd.f32 %v1460, 1.0
      %v1490 = vadd.f32 %v1462, 1.0
      %v1491 = vadd.f32 %v1464, 1.0
      %v1492 = vadd.f32 %v1466, 1.0
      %v1493 = vadd.f32 %v1468, 1.0
      %v1494 = vadd.f32 %v1470, 1.0
      %v1495 = vadd.f32 %v1472, 1.0
      %v1496 = vadd.f32 %v1474, 1.0
      %v1497 = vadd.f32 %v1476, 1.0
      %v1498 = vadd.f32 %v1478, 1.0
      %v1499 = vadd.f32 %v1480, 1.0
      %v1500 = vadd.f32 %v1482, 1.0
      %v1501 = vadd.f32 %v1484, 1.0
      %v1502 = vadd.f32 %v1486, 1.0
      %v1503 = vrcp.pop %v1487
      %v1504 = vmul.f32 1.0, %v1503
      %v1505 = vrcp.pop %v1488
      %v1506 = vmul.f32 1.0, %v1505
      %v1507 = vrcp.pop %v1489
      %v1508 = vmul.f32 1.0, %v1507
      %v1509 = vrcp.pop %v1490
      %v1510 = vmul.f32 1.0, %v1509
      %v1511 = vrcp.pop %v1491
      %v1512 = vmul.f32 1.0, %v1511
      %v1513 = vrcp.pop %v1492
      %v1514 = vmul.f32 1.0, %v1513
      %v1515 = vrcp.pop %v1493
      %v1516 = vmul.f32 1.0, %v1515
      %v1517 = vrcp.pop %v1494
      %v1518 = vmul.f32 1.0, %v1517
      %v1519 = vrcp.pop %v1495
      %v1520 = vmul.f32 1.0, %v1519
      %v1521 = vrcp.pop %v1496
      %v1522 = vmul.f32 1.0, %v1521
      %v1523 = vrcp.pop %v1497
      %v1524 = vmul.f32 1.0, %v1523
      %v1525 = vrcp.pop %v1498
      %v1526 = vmul.f32 1.0, %v1525
      %v1527 = vrcp.pop %v1499
      %v1528 = vmul.f32 1.0, %v1527
      %v1529 = vrcp.pop %v1500
      %v1530 = vmul.f32 1.0, %v1529
      %v1531 = vrcp.pop %v1501
      %v1532 = vmul.f32 1.0, %v1531
      %v1533 = vrcp.pop %v1502
      %v1534 = vmul.f32 1.0, %v1533
      %vm1535 = vcmask 7168
      %1536 = vst.msk [vmem:[%s270] sm:$0xff] %vm1535, %v1504
      %1537 = vst.msk [vmem:[%s270 + $0x8] sm:$0xff] %vm1535, %v1506
      %1538 = vst.msk [vmem:[%s270 + $0x10] sm:$0xff] %vm1535, %v1508
      %1539 = vst.msk [vmem:[%s270 + $0x18] sm:$0xff] %vm1535, %v1510
      %1540 = vst.msk [vmem:[%s270 + $0x20] sm:$0xff] %vm1535, %v1512
      %1541 = vst.msk [vmem:[%s270 + $0x28] sm:$0xff] %vm1535, %v1514
      %1542 = vst.msk [vmem:[%s270 + $0x30] sm:$0xff] %vm1535, %v1516
      %1543 = vst.msk [vmem:[%s270 + $0x38] sm:$0xff] %vm1535, %v1518
      %1544 = vst.msk [vmem:[%s270 + $0x40] sm:$0xff] %vm1535, %v1520
      %1545 = vst.msk [vmem:[%s270 + $0x48] sm:$0xff] %vm1535, %v1522
      %1546 = vst.msk [vmem:[%s270 + $0x50] sm:$0xff] %vm1535, %v1524
      %1547 = vst.msk [vmem:[%s270 + $0x58] sm:$0xff] %vm1535, %v1526
      %1548 = vst.msk [vmem:[%s270 + $0x60] sm:$0xff] %vm1535, %v1528
      %1549 = vst.msk [vmem:[%s270 + $0x68] sm:$0xff] %vm1535, %v1530
      %1550 = vst.msk [vmem:[%s270 + $0x70] sm:$0xff] %vm1535, %v1532
      %1551 = vst.msk [vmem:[%s270 + $0x78] sm:$0xff] %vm1535, %v1534
      %s1552 = smul.u32 16, %s16
      %p1553 = scmp.lt.s32.totalorder %s1552, 31
      %s1554 = scalar_select %p1553, %s1552, 31
      %s1555 = smul.addr %s1554, 8
      %s1556 = scalar_lea.vmem %s5, %s1555
      // Predicated region
      $region41: #{widedeep_forward_pallas.1} parent=39 // pred_check
        %p1557 = pneg %p154
      $region42: #{widedeep_forward_pallas.1} parent=39 // pred_check_branch
        %1559 = sbr.rel (%p1557) target = $region44
      $region43: #{widedeep_forward_pallas.1} parent=39 // pred_region
        %s1560 = smul.u32 16, %s16
      $region44: #{widedeep_forward_pallas.1} parent=39 // pred_fallthru
        _
    $region40: #{widedeep_forward_pallas.1} parent=5 // pred_fallthru
      _
    %p1561 = scmp.le.s32.totalorder 2, %s11
    // Predicated region
    $region45: #{widedeep_forward_pallas.1} parent=5 // pred_check
      %p1562 = pneg %p1561
    $region46: #{widedeep_forward_pallas.1} parent=5 // pred_check_branch
      %1564 = sbr.rel (%p1562) target = $region48
    $region47: #{widedeep_forward_pallas.1} parent=5 // pred_region
      %s1565 = ssub.s32 %s11, 2
      // Predicated region
      $region49: #{widedeep_forward_pallas.1} parent=47 // pred_check
        %p1566 = pneg %p160
      $region50: #{widedeep_forward_pallas.1} parent=47 // pred_check_branch
        %1568 = sbr.rel (%p1566) target = $region52
      $region51: #{widedeep_forward_pallas.1} parent=47 // pred_region
        %s1569 = smul.u32 16, %s17
        %p1570 = scmp.lt.s32.totalorder %s1569, 31
        %s1571 = scalar_select %p1570, %s1569, 31
        %s1572 = smul.addr %s1571, 8
        %s1573 = scalar_lea.vmem %s5, %s1572
      $region52: #{widedeep_forward_pallas.1} parent=47 // pred_fallthru
        _
    $region48: #{widedeep_forward_pallas.1} parent=5 // pred_fallthru
      _
  $region6: #{widedeep_forward_pallas.1} parent=0 // loop_footer
    %s15 = sadd.s32 1, %s11
  $region7: #{widedeep_forward_pallas.1} parent=0 // loop_footer_branch
    %10 = sbr.rel target = $region3
  $region8: #{widedeep_forward_pallas.1} parent=0 // loop_exit
    _

</llo_original>
